<compile_context>
chip_gen: v7x
topology: tpu7x:2x2x1
jax: 0.10.0
libtpu: 0.0.40
codegen_flags: <defaults>
</compile_context>

<pallas_src>
import functools

import jax
import jax.numpy as jnp
from jax.experimental import pallas as pl
from jax.experimental.pallas import tpu as pltpu


def _bn_kernel(x_ref, gb_ref, o_ref, *, eps, inv_count):
    # x_ref:  (tc, S)  one tile of channels x all flattened batch*spatial
    # gb_ref: (tc, 2)  packed per-channel [gamma, beta] for this tile
    # o_ref:  (tc, S)
    x = x_ref[...]

    # Single-pass batch statistics (lane reductions).
    s1 = jnp.sum(x, axis=-1, keepdims=True)              # (tc, 1)
    s2 = jnp.sum(x * x, axis=-1, keepdims=True)          # (tc, 1)
    mean = s1 * inv_count
    # PyTorch BatchNorm normalizes with the *biased* variance in training mode.
    var = s2 * inv_count - mean * mean
    inv = jax.lax.rsqrt(var + eps)

    gamma = gb_ref[:, 0:1]                               # (tc, 1)
    beta = gb_ref[:, 1:2]                                # (tc, 1)

    # Fold normalization + affine into one per-channel FMA: o = x*scale + shift
    scale = inv * gamma
    shift = beta - mean * scale
    o_ref[...] = x * scale + shift


def _pick_channel_tile(C):
    """Per-TPU-generation channel tile (grid = C // tc)."""
    try:
        kind = jax.devices()[0].device_kind.lower()
    except Exception:  # pragma: no cover - defensive
        kind = ""

    def ok(tc):
        return 0 < tc <= C and C % tc == 0 and tc % 8 == 0

    if "v7" in kind or "7x" in kind:
        # 2 TensorCores: even grid with >= 2 steps per core so each core
        # overlaps DMA-in/out with compute.
        prefs = (200, 600, C)
    elif "v5" in kind:
        # Single TC, slowest HBM: minimize per-step overhead -> grid = 1.
        prefs = (C, 600, 200)
    else:
        # v6e and default: grid = 2.
        prefs = (600, 400, 200, C)

    for tc in prefs:
        if ok(tc):
            return tc
    # Fallback: largest 8-aligned divisor of C, else the whole channel dim.
    for tc in range(min(C, 1024) // 8 * 8, 0, -8):
        if C % tc == 0:
            return tc
    return C


def batchnorm2d(x_nchw, gamma, beta, *, eps=1e-3, tc=None):
    """Training-mode (batch-stats) BatchNorm2d forward for NCHW input."""
    N, C, H, W = x_nchw.shape
    S = N * H * W

    # Channel-major 2-D view.  Pure reshape when N == 1 (the module's case);
    # N > 1 needs one transpose so each channel occupies a single row.
    if N == 1:
        x2 = x_nchw.reshape(C, S)
    else:
        x2 = jnp.transpose(x_nchw, (1, 0, 2, 3)).reshape(C, S)
    x2 = x2.astype(jnp.float32)

    if tc is None:
        tc = _pick_channel_tile(C)
    assert C % tc == 0, "channel tile must divide C"
    assert tc % 8 == 0 or tc == C, "channel tile must be sublane-aligned"

    # Pack gamma/beta into one (C, 2) array: one small per-step block instead
    # of two lane-padded resident (C, 1) buffers and a dynamic sublane slice.
    gb = jnp.stack(
        [gamma.astype(jnp.float32), beta.astype(jnp.float32)], axis=1)  # (C, 2)

    out = pl.pallas_call(
        functools.partial(_bn_kernel, eps=float(eps), inv_count=1.0 / float(S)),
        out_shape=jax.ShapeDtypeStruct((C, S), jnp.float32),
        grid=(C // tc,),
        in_specs=[
            pl.BlockSpec((tc, S), lambda i: (i, 0)),
            pl.BlockSpec((tc, 2), lambda i: (i, 0)),
        ],
        out_specs=pl.BlockSpec((tc, S), lambda i: (i, 0)),
        compiler_params=pltpu.CompilerParams(
            dimension_semantics=("parallel",)),
    )(x2, gb)

    if N == 1:
        return out.reshape(N, C, H, W).astype(x_nchw.dtype)
    return jnp.transpose(
        out.reshape(C, N, H, W), (1, 0, 2, 3)).astype(x_nchw.dtype)


def _reference(x, gamma, beta, eps=1e-3):
    mean = jnp.mean(x, axis=(0, 2, 3), keepdims=True)
    var = jnp.mean((x - mean) ** 2, axis=(0, 2, 3), keepdims=True)
    g = gamma.reshape(1, -1, 1, 1)
    b = beta.reshape(1, -1, 1, 1)
    return (x - mean) * jax.lax.rsqrt(var + eps) * g + b


if __name__ == "__main__":
    key = jax.random.PRNGKey(0)
    kx, kg, kb = jax.random.split(key, 3)

    # Shapes implied by the module: BatchNorm2d(1200) on [1, 1200, 14, 14].
    N, C, H, W = 1, 1200, 14, 14
    x = jax.random.normal(kx, (N, C, H, W), dtype=jnp.float32)
    # PyTorch default affine init is weight=1, bias=0; use random values so the
    # affine path is actually exercised.
    gamma = 1.0 + 0.1 * jax.random.normal(kg, (C,), dtype=jnp.float32)
    beta = 0.1 * jax.random.normal(kb, (C,), dtype=jnp.float32)

    out = batchnorm2d(x, gamma, beta, eps=1e-3)
    out = jax.block_until_ready(out)

    ref = _reference(x, gamma, beta, eps=1e-3)
    assert out.shape == (N, C, H, W)
    assert jnp.allclose(out, ref, atol=1e-4, rtol=1e-4)

    # TODO(synk): running_mean/running_var momentum updates (track_running_stats)
    # are not produced; only the forward activation x434 is returned.

    print("KERNEL_OK")
</pallas_src>

<mosaic_0001>
module attributes {stable_mosaic.version = 11 : i64} {
  func.func @_bn_kernel(%arg0: i32, %arg1: memref<600x196xf32, #tpu.memory_space<vmem>>, %arg2: memref<600x2xf32, #tpu.memory_space<vmem>>, %arg3: memref<600x196xf32, #tpu.memory_space<vmem>>) attributes {dimension_semantics = [#tpu.dimension_semantics<parallel>], iteration_bounds = array<i64: 2>, scalar_prefetch = 0 : i64, scratch_operands = 0 : i64, tpu.core_type = #tpu.core_type<tc>, window_params = [{transform_indices = @transform_0, window_bounds = array<i64: 600, 196>}, {transform_indices = @transform_1, window_bounds = array<i64: 600, 2>}, {transform_indices = @transform_2, window_bounds = array<i64: 600, 196>}]} {
    %c0 = arith.constant 0 : index
    %c0_0 = arith.constant 0 : index
    %0 = vector.load %arg1[%c0, %c0_0] : memref<600x196xf32, #tpu.memory_space<vmem>>, vector<600x196xf32>
    %cst = arith.constant dense<0.000000e+00> : vector<600xf32>
    %1 = vector.multi_reduction <add>, %0, %cst [1] : vector<600x196xf32> to vector<600xf32>
    %2 = vector.shape_cast %1 : vector<600xf32> to vector<600x1xf32>
    %3 = arith.mulf %0, %0 : vector<600x196xf32>
    %cst_1 = arith.constant dense<0.000000e+00> : vector<600xf32>
    %4 = vector.multi_reduction <add>, %3, %cst_1 [1] : vector<600x196xf32> to vector<600xf32>
    %5 = vector.shape_cast %4 : vector<600xf32> to vector<600x1xf32>
    %cst_2 = arith.constant 0.00510204071 : f32
    %6 = vector.broadcast %cst_2 : f32 to vector<600x1xf32>
    %7 = arith.mulf %2, %6 : vector<600x1xf32>
    %cst_3 = arith.constant 0.00510204071 : f32
    %8 = vector.broadcast %cst_3 : f32 to vector<600x1xf32>
    %9 = arith.mulf %5, %8 : vector<600x1xf32>
    %10 = arith.mulf %7, %7 : vector<600x1xf32>
    %11 = arith.subf %9, %10 : vector<600x1xf32>
    %cst_4 = arith.constant 1.000000e-03 : f32
    %12 = vector.broadcast %cst_4 : f32 to vector<600x1xf32>
    %13 = arith.addf %11, %12 : vector<600x1xf32>
    %14 = math.rsqrt %13 : vector<600x1xf32>
    %c0_5 = arith.constant 0 : index
    %c0_6 = arith.constant 0 : index
    %15 = vector.load %arg2[%c0_5, %c0_6] : memref<600x2xf32, #tpu.memory_space<vmem>>, vector<600x1xf32>
    %c0_7 = arith.constant 0 : index
    %c1 = arith.constant 1 : index
    %16 = vector.load %arg2[%c0_7, %c1] : memref<600x2xf32, #tpu.memory_space<vmem>>, vector<600x1xf32>
    %17 = arith.mulf %14, %15 : vector<600x1xf32>
    %18 = arith.mulf %7, %17 : vector<600x1xf32>
    %19 = arith.subf %16, %18 : vector<600x1xf32>
    %20 = vector.broadcast %17 : vector<600x1xf32> to vector<600x196xf32>
    %21 = arith.mulf %0, %20 : vector<600x196xf32>
    %22 = vector.broadcast %19 : vector<600x1xf32> to vector<600x196xf32>
    %23 = arith.addf %21, %22 : vector<600x196xf32>
    %c0_8 = arith.constant 0 : index
    %c0_9 = arith.constant 0 : index
    %24 = vector.load %arg3[%c0_8, %c0_9] : memref<600x196xf32, #tpu.memory_space<vmem>>, vector<600x196xf32>
    tpu.vector_store %arg3[%c0_8, %c0_9], %23 {strides = array<i32>} : memref<600x196xf32, #tpu.memory_space<vmem>>, vector<600x196xf32>,
    return
  }
  func.func @transform_0(%arg0: i32) -> (i32, i32) {
    %c0_i32 = arith.constant 0 : i32
    %c0_i32_0 = arith.constant 0 : i32
    return %arg0, %c0_i32 : i32, i32
  }
  func.func @transform_1(%arg0: i32) -> (i32, i32) {
    %c0_i32 = arith.constant 0 : i32
    %c0_i32_0 = arith.constant 0 : i32
    return %arg0, %c0_i32 : i32, i32
  }
  func.func @transform_2(%arg0: i32) -> (i32, i32) {
    %c0_i32 = arith.constant 0 : i32
    %c0_i32_0 = arith.constant 0 : i32
    return %arg0, %c0_i32 : i32, i32
  }
}

</mosaic_0001>

<llo_original>
// kernel: tpu_custom_call.1
$region0: #{tpu_custom_call.1}
  #allocation0 [shape = 'u32[]', space=smem, size = 0x4, offset = 0x4, fixed_abs, tag = 'smem constant byte address 0x4 - core index']
  #allocation1 [shape = 'u32[144,128]{1,0:T(1,128)}', space=vmem, size = 0x12000, scoped, tag = 'internal scratch']
  %s0 = inlined_call_operand.vmem [shape: f32[1200,196], index: 0, kind: input, shape index: {}]
  %s1 = inlined_call_operand.vmem [shape: f32[1200,2], index: 1, kind: input, shape index: {}]
  %s2 = inlined_call_operand.vmem [shape: f32[1200,196], index: 2, kind: output, shape index: {}]
  %s3 = sld [smem:[#allocation0]]
  $region41: #{tpu_custom_call.1} parent=0
    _
  %s5 = ssub.s32 1, %s3
  %s6 = scalar_select 0, %s5, %s3
  loop: start=0, step=1, limit=4
  $region2: #{tpu_custom_call.1} parent=0 // loop_pre_header
    _
  $region3: #{tpu_custom_call.1} parent=0 // loop_header
    %s8 = sphi 0, %s12
    %p9 = scmp.ge.s32.totalorder %s8, 4
    %s18 = sphi 0, %s20
    %s21 = sphi 0, %s18
    %s22 = sphi 0, %s21
    %s38 = sphi 0, %s22
    %s44 = sphi 0, %s46
    %s47 = sphi 0, %s44
    %s48 = sphi 0, %s47
    %s64 = sphi 0, %s48
    %s70 = sphi 0, %s72
    %s73 = sphi 0, %s70
    %s74 = sphi 0, %s73
    %s90 = sphi 0, %s74
  $region4: #{tpu_custom_call.1} parent=0 // loop_header_branch
    %11 = sbr.rel (%p9) target = $region8
  $region5: #{tpu_custom_call.1} parent=0 // loop_body
    %s13 = ssub.s32 %s8, 1
    %s14 = ssub.s32 %s8, 2
    %s15 = sadd.s32 %s8, 1
    %s16 = ssub.s32 %s8, %s15
    %p17 = scmp.eq.s32.totalorder %s16, 0
    %s19 = sadd.s32 %s18, 1
    %s20 = scalar_select %p17, %s18, %s19
    %p23 = pneg %p17
    %p24 = scmp.eq.s32.totalorder %s8, 1
    %p25 = por %p23, %p24
    %p26 = scmp.ne.s32.totalorder %s18, %s21
    %p27 = scmp.eq.s32.totalorder %s8, 0
    %p28 = por %p26, %p27
    %p29 = scmp.ne.s32.totalorder %s18, %s21
    %p30 = scmp.eq.s32.totalorder %s13, 1
    %p31 = por %p29, %p30
    %p32 = scmp.ne.s32.totalorder %s21, %s22
    %p33 = scmp.eq.s32.totalorder %s13, 0
    %p34 = por %p32, %p33
    %p35 = scmp.ne.s32.totalorder %s21, %s22
    %p36 = scmp.eq.s32.totalorder %s14, 1
    %p37 = por %p35, %p36
    %p39 = scmp.ne.s32.totalorder %s22, %s38
    %p40 = scmp.eq.s32.totalorder %s14, 0
    %p41 = por %p39, %p40
    %s42 = ssub.s32 %s8, %s15
    %p43 = scmp.eq.s32.totalorder %s42, 0
    %s45 = sadd.s32 %s44, 1
    %s46 = scalar_select %p43, %s44, %s45
    %p49 = pneg %p43
    %p50 = scmp.eq.s32.totalorder %s8, 1
    %p51 = por %p49, %p50
    %p52 = scmp.ne.s32.totalorder %s44, %s47
    %p53 = scmp.eq.s32.totalorder %s8, 0
    %p54 = por %p52, %p53
    %p55 = scmp.ne.s32.totalorder %s44, %s47
    %p56 = scmp.eq.s32.totalorder %s13, 1
    %p57 = por %p55, %p56
    %p58 = scmp.ne.s32.totalorder %s47, %s48
    %p59 = scmp.eq.s32.totalorder %s13, 0
    %p60 = por %p58, %p59
    %p61 = scmp.ne.s32.totalorder %s47, %s48
    %p62 = scmp.eq.s32.totalorder %s14, 1
    %p63 = por %p61, %p62
    %p65 = scmp.ne.s32.totalorder %s48, %s64
    %p66 = scmp.eq.s32.totalorder %s14, 0
    %p67 = por %p65, %p66
    %s68 = ssub.s32 %s8, %s15
    %p69 = scmp.eq.s32.totalorder %s68, 0
    %s71 = sadd.s32 %s70, 1
    %s72 = scalar_select %p69, %s70, %s71
    %p75 = pneg %p69
    %p76 = scmp.eq.s32.totalorder %s8, 1
    %p77 = por %p75, %p76
    %p78 = scmp.ne.s32.totalorder %s70, %s73
    %p79 = scmp.eq.s32.totalorder %s8, 0
    %p80 = por %p78, %p79
    %p81 = scmp.ne.s32.totalorder %s70, %s73
    %p82 = scmp.eq.s32.totalorder %s13, 1
    %p83 = por %p81, %p82
    %p84 = scmp.ne.s32.totalorder %s73, %s74
    %p85 = scmp.eq.s32.totalorder %s13, 0
    %p86 = por %p84, %p85
    %p87 = scmp.ne.s32.totalorder %s73, %s74
    %p88 = scmp.eq.s32.totalorder %s14, 1
    %p89 = por %p87, %p88
    %p91 = scmp.ne.s32.totalorder %s74, %s90
    %p92 = scmp.eq.s32.totalorder %s14, 0
    %p93 = por %p91, %p92
    %p94 = scmp.le.s32.totalorder 1, %s8
    %p95 = scmp.lt.s32.totalorder %s8, 3
    %p96 = pnand %p94, %p95
    %p97 = pneg %p96
    // Predicated region
    $region9: #{tpu_custom_call.1} parent=5 // pred_check
      _
    $region10: #{tpu_custom_call.1} parent=5 // pred_check_branch
      %99 = sbr.rel (%p96) target = $region12
    $region11: #{tpu_custom_call.1} parent=5 // pred_region
      %s100 = ssub.s32 %s8, 1
    $region12: #{tpu_custom_call.1} parent=5 // pred_fallthru
      _
    %p101 = scmp.lt.s32.totalorder %s8, 2
    // Predicated region
    $region13: #{tpu_custom_call.1} parent=5 // pred_check
      %p102 = pneg %p101
    $region14: #{tpu_custom_call.1} parent=5 // pred_check_branch
      %104 = sbr.rel (%p102) target = $region16
    $region15: #{tpu_custom_call.1} parent=5 // pred_region
      // Predicated region
      $region17: #{tpu_custom_call.1} parent=15 // pred_check
        %p105 = pneg %p28
      $region18: #{tpu_custom_call.1} parent=15 // pred_check_branch
        %107 = sbr.rel (%p105) target = $region20
      $region19: #{tpu_custom_call.1} parent=15 // pred_region
        %s108 = smul.u32 75, %s8
        %p109 = scmp.lt.s32.totalorder %s108, 149
        %s110 = scalar_select %p109, %s108, 149
        %s111 = smul.addr %s110, 2
        %s112 = smul.addr %s111, 8
        %s113 = scalar_lea.vmem %s0, %s112
        %s114 = smul.u32 75, %s8
      $region20: #{tpu_custom_call.1} parent=15 // pred_fallthru
        _
      // Predicated region
      $region21: #{tpu_custom_call.1} parent=15 // pred_check
        %p115 = pneg %p54
      $region22: #{tpu_custom_call.1} parent=15 // pred_check_branch
        %117 = sbr.rel (%p115) target = $region24
      $region23: #{tpu_custom_call.1} parent=15 // pred_region
        %s118 = smul.u32 75, %s8
        %p119 = scmp.lt.s32.totalorder %s118, 149
        %s120 = scalar_select %p119, %s118, 149
        %s121 = smul.addr %s120, 8
        %s122 = scalar_lea.vmem %s1, %s121
        %s123 = smul.u32 75, %s8
      $region24: #{tpu_custom_call.1} parent=15 // pred_fallthru
        _
    $region16: #{tpu_custom_call.1} parent=5 // pred_fallthru
      _
    %p124 = scmp.le.s32.totalorder 1, %s8
    %p125 = scmp.lt.s32.totalorder %s8, 3
    %p126 = pnand %p124, %p125
    %p127 = pneg %p126
    // Predicated region
    $region25: #{tpu_custom_call.1} parent=5 // pred_check
      _
    $region26: #{tpu_custom_call.1} parent=5 // pred_check_branch
      %129 = sbr.rel (%p126) target = $region28
    $region27: #{tpu_custom_call.1} parent=5 // pred_region
      %s130 = ssub.s32 %s8, 1
      %s131 = smul.u32 75, %s13
      %p132 = scmp.lt.s32.totalorder %s131, 149
      %s133 = scalar_select %p132, %s131, 149
      %s134 = smul.addr %s133, 2
      %s135 = smul.addr %s134, 8
      %s136 = scalar_lea.vmem %s0, %s135
      %p137 = pneg %p34
      %p138 = pneg %p31
      %s139 = smul.u32 75, %s13
      %p140 = scmp.lt.s32.totalorder %s139, 149
      %s141 = scalar_select %p140, %s139, 149
      %s142 = smul.addr %s141, 8
      %s143 = scalar_lea.vmem %s1, %s142
      %p144 = pneg %p60
      %p145 = pneg %p57
      %p146 = pneg %p86
      %p147 = pneg %p83
      %s148 = smul.u32 75, %s13
      %p149 = scmp.lt.s32.totalorder %s148, 149
      %s150 = scalar_select %p149, %s148, 149
      %s151 = smul.addr %s150, 2
      %s152 = smul.addr %s151, 8
      %s153 = scalar_lea.vmem %s2, %s152
      %s154 = smul.u32 75, %s13
      %p155 = scmp.lt.s32.totalorder %s154, 149
      %s156 = scalar_select %p155, %s154, 149
      %s157 = smul.addr %s156, 2
      %s158 = smul.addr %s157, 8
      %s159 = scalar_lea.vmem %s0, %s158
      %s160 = smul.u32 75, %s13
      %s161 = smul.u32 75, %s13
      %p162 = scmp.lt.s32.totalorder %s161, 149
      %s163 = scalar_select %p162, %s161, 149
      %s164 = smul.addr %s163, 8
      %s165 = scalar_lea.vmem %s1, %s164
      %s166 = smul.u32 75, %s13
      %s167 = smul.u32 75, %s13
      %p168 = scmp.lt.s32.totalorder %s167, 149
      %s169 = scalar_select %p168, %s167, 149
      %s170 = smul.addr %s169, 2
      %s171 = smul.addr %s170, 8
      %s172 = scalar_lea.vmem %s2, %s171
      %s173 = smul.u32 75, %s13
      %v174 = vld [vmem:[%s159] sm:$0xff]
      %v175 = vld [vmem:[%s159 + $0x8] sm:$0xff]
      %v176 = vld [vmem:[%s159 + $0x10] sm:$0xff]
      %v177 = vld [vmem:[%s159 + $0x18] sm:$0xff]
      %v178 = vld [vmem:[%s159 + $0x20] sm:$0xff]
      %v179 = vld [vmem:[%s159 + $0x28] sm:$0xff]
      %v180 = vld [vmem:[%s159 + $0x30] sm:$0xff]
      %v181 = vld [vmem:[%s159 + $0x38] sm:$0xff]
      %v182 = vld [vmem:[%s159 + $0x40] sm:$0xff]
      %v183 = vld [vmem:[%s159 + $0x48] sm:$0xff]
      %v184 = vld [vmem:[%s159 + $0x50] sm:$0xff]
      %v185 = vld [vmem:[%s159 + $0x58] sm:$0xff]
      %v186 = vld [vmem:[%s159 + $0x60] sm:$0xff]
      %v187 = vld [vmem:[%s159 + $0x68] sm:$0xff]
      %v188 = vld [vmem:[%s159 + $0x70] sm:$0xff]
      %v189 = vld [vmem:[%s159 + $0x78] sm:$0xff]
      %v190 = vld [vmem:[%s159 + $0x80] sm:$0xff]
      %v191 = vld [vmem:[%s159 + $0x88] sm:$0xff]
      %v192 = vld [vmem:[%s159 + $0x90] sm:$0xff]
      %v193 = vld [vmem:[%s159 + $0x98] sm:$0xff]
      %v194 = vld [vmem:[%s159 + $0xa0] sm:$0xff]
      %v195 = vld [vmem:[%s159 + $0xa8] sm:$0xff]
      %v196 = vld [vmem:[%s159 + $0xb0] sm:$0xff]
      %v197 = vld [vmem:[%s159 + $0xb8] sm:$0xff]
      %v198 = vld [vmem:[%s159 + $0xc0] sm:$0xff]
      %v199 = vld [vmem:[%s159 + $0xc8] sm:$0xff]
      %v200 = vld [vmem:[%s159 + $0xd0] sm:$0xff]
      %v201 = vld [vmem:[%s159 + $0xd8] sm:$0xff]
      %v202 = vld [vmem:[%s159 + $0xe0] sm:$0xff]
      %v203 = vld [vmem:[%s159 + $0xe8] sm:$0xff]
      %v204 = vld [vmem:[%s159 + $0xf0] sm:$0xff]
      %v205 = vld [vmem:[%s159 + $0xf8] sm:$0xff]
      %v206 = vld [vmem:[%s159 + $0x100] sm:$0xff]
      %v207 = vld [vmem:[%s159 + $0x108] sm:$0xff]
      %v208 = vld [vmem:[%s159 + $0x110] sm:$0xff]
      %v209 = vld [vmem:[%s159 + $0x118] sm:$0xff]
      %v210 = vld [vmem:[%s159 + $0x120] sm:$0xff]
      %v211 = vld [vmem:[%s159 + $0x128] sm:$0xff]
      %v212 = vld [vmem:[%s159 + $0x130] sm:$0xff]
      %v213 = vld [vmem:[%s159 + $0x138] sm:$0xff]
      %v214 = vld [vmem:[%s159 + $0x140] sm:$0xff]
      %v215 = vld [vmem:[%s159 + $0x148] sm:$0xff]
      %v216 = vld [vmem:[%s159 + $0x150] sm:$0xff]
      %v217 = vld [vmem:[%s159 + $0x158] sm:$0xff]
      %v218 = vld [vmem:[%s159 + $0x160] sm:$0xff]
      %v219 = vld [vmem:[%s159 + $0x168] sm:$0xff]
      %v220 = vld [vmem:[%s159 + $0x170] sm:$0xff]
      %v221 = vld [vmem:[%s159 + $0x178] sm:$0xff]
      %v222 = vld [vmem:[%s159 + $0x180] sm:$0xff]
      %v223 = vld [vmem:[%s159 + $0x188] sm:$0xff]
      %v224 = vld [vmem:[%s159 + $0x190] sm:$0xff]
      %v225 = vld [vmem:[%s159 + $0x198] sm:$0xff]
      %v226 = vld [vmem:[%s159 + $0x1a0] sm:$0xff]
      %v227 = vld [vmem:[%s159 + $0x1a8] sm:$0xff]
      %v228 = vld [vmem:[%s159 + $0x1b0] sm:$0xff]
      %v229 = vld [vmem:[%s159 + $0x1b8] sm:$0xff]
      %v230 = vld [vmem:[%s159 + $0x1c0] sm:$0xff]
      %v231 = vld [vmem:[%s159 + $0x1c8] sm:$0xff]
      %v232 = vld [vmem:[%s159 + $0x1d0] sm:$0xff]
      %v233 = vld [vmem:[%s159 + $0x1d8] sm:$0xff]
      %v234 = vld [vmem:[%s159 + $0x1e0] sm:$0xff]
      %v235 = vld [vmem:[%s159 + $0x1e8] sm:$0xff]
      %v236 = vld [vmem:[%s159 + $0x1f0] sm:$0xff]
      %v237 = vld [vmem:[%s159 + $0x1f8] sm:$0xff]
      %v238 = vld [vmem:[%s159 + $0x200] sm:$0xff]
      %v239 = vld [vmem:[%s159 + $0x208] sm:$0xff]
      %v240 = vld [vmem:[%s159 + $0x210] sm:$0xff]
      %v241 = vld [vmem:[%s159 + $0x218] sm:$0xff]
      %v242 = vld [vmem:[%s159 + $0x220] sm:$0xff]
      %v243 = vld [vmem:[%s159 + $0x228] sm:$0xff]
      %v244 = vld [vmem:[%s159 + $0x230] sm:$0xff]
      %v245 = vld [vmem:[%s159 + $0x238] sm:$0xff]
      %v246 = vld [vmem:[%s159 + $0x240] sm:$0xff]
      %v247 = vld [vmem:[%s159 + $0x248] sm:$0xff]
      %v248 = vld [vmem:[%s159 + $0x250] sm:$0xff]
      %v249 = vld [vmem:[%s159 + $0x258] sm:$0xff]
      %v250 = vld [vmem:[%s159 + $0x260] sm:$0xff]
      %v251 = vld [vmem:[%s159 + $0x268] sm:$0xff]
      %v252 = vld [vmem:[%s159 + $0x270] sm:$0xff]
      %v253 = vld [vmem:[%s159 + $0x278] sm:$0xff]
      %v254 = vld [vmem:[%s159 + $0x280] sm:$0xff]
      %v255 = vld [vmem:[%s159 + $0x288] sm:$0xff]
      %v256 = vld [vmem:[%s159 + $0x290] sm:$0xff]
      %v257 = vld [vmem:[%s159 + $0x298] sm:$0xff]
      %v258 = vld [vmem:[%s159 + $0x2a0] sm:$0xff]
      %v259 = vld [vmem:[%s159 + $0x2a8] sm:$0xff]
      %v260 = vld [vmem:[%s159 + $0x2b0] sm:$0xff]
      %v261 = vld [vmem:[%s159 + $0x2b8] sm:$0xff]
      %v262 = vld [vmem:[%s159 + $0x2c0] sm:$0xff]
      %v263 = vld [vmem:[%s159 + $0x2c8] sm:$0xff]
      %v264 = vld [vmem:[%s159 + $0x2d0] sm:$0xff]
      %v265 = vld [vmem:[%s159 + $0x2d8] sm:$0xff]
      %v266 = vld [vmem:[%s159 + $0x2e0] sm:$0xff]
      %v267 = vld [vmem:[%s159 + $0x2e8] sm:$0xff]
      %v268 = vld [vmem:[%s159 + $0x2f0] sm:$0xff]
      %v269 = vld [vmem:[%s159 + $0x2f8] sm:$0xff]
      %v270 = vld [vmem:[%s159 + $0x300] sm:$0xff]
      %v271 = vld [vmem:[%s159 + $0x308] sm:$0xff]
      %v272 = vld [vmem:[%s159 + $0x310] sm:$0xff]
      %v273 = vld [vmem:[%s159 + $0x318] sm:$0xff]
      %v274 = vld [vmem:[%s159 + $0x320] sm:$0xff]
      %v275 = vld [vmem:[%s159 + $0x328] sm:$0xff]
      %v276 = vld [vmem:[%s159 + $0x330] sm:$0xff]
      %v277 = vld [vmem:[%s159 + $0x338] sm:$0xff]
      %v278 = vld [vmem:[%s159 + $0x340] sm:$0xff]
      %v279 = vld [vmem:[%s159 + $0x348] sm:$0xff]
      %v280 = vld [vmem:[%s159 + $0x350] sm:$0xff]
      %v281 = vld [vmem:[%s159 + $0x358] sm:$0xff]
      %v282 = vld [vmem:[%s159 + $0x360] sm:$0xff]
      %v283 = vld [vmem:[%s159 + $0x368] sm:$0xff]
      %v284 = vld [vmem:[%s159 + $0x370] sm:$0xff]
      %v285 = vld [vmem:[%s159 + $0x378] sm:$0xff]
      %v286 = vld [vmem:[%s159 + $0x380] sm:$0xff]
      %v287 = vld [vmem:[%s159 + $0x388] sm:$0xff]
      %v288 = vld [vmem:[%s159 + $0x390] sm:$0xff]
      %v289 = vld [vmem:[%s159 + $0x398] sm:$0xff]
      %v290 = vld [vmem:[%s159 + $0x3a0] sm:$0xff]
      %v291 = vld [vmem:[%s159 + $0x3a8] sm:$0xff]
      %v292 = vld [vmem:[%s159 + $0x3b0] sm:$0xff]
      %v293 = vld [vmem:[%s159 + $0x3b8] sm:$0xff]
      %v294 = vld [vmem:[%s159 + $0x3c0] sm:$0xff]
      %v295 = vld [vmem:[%s159 + $0x3c8] sm:$0xff]
      %v296 = vld [vmem:[%s159 + $0x3d0] sm:$0xff]
      %v297 = vld [vmem:[%s159 + $0x3d8] sm:$0xff]
      %v298 = vld [vmem:[%s159 + $0x3e0] sm:$0xff]
      %v299 = vld [vmem:[%s159 + $0x3e8] sm:$0xff]
      %v300 = vld [vmem:[%s159 + $0x3f0] sm:$0xff]
      %v301 = vld [vmem:[%s159 + $0x3f8] sm:$0xff]
      %v302 = vld [vmem:[%s159 + $0x400] sm:$0xff]
      %v303 = vld [vmem:[%s159 + $0x408] sm:$0xff]
      %v304 = vld [vmem:[%s159 + $0x410] sm:$0xff]
      %v305 = vld [vmem:[%s159 + $0x418] sm:$0xff]
      %v306 = vld [vmem:[%s159 + $0x420] sm:$0xff]
      %v307 = vld [vmem:[%s159 + $0x428] sm:$0xff]
      %v308 = vld [vmem:[%s159 + $0x430] sm:$0xff]
      %v309 = vld [vmem:[%s159 + $0x438] sm:$0xff]
      %v310 = vld [vmem:[%s159 + $0x440] sm:$0xff]
      %v311 = vld [vmem:[%s159 + $0x448] sm:$0xff]
      %v312 = vld [vmem:[%s159 + $0x450] sm:$0xff]
      %v313 = vld [vmem:[%s159 + $0x458] sm:$0xff]
      %v314 = vld [vmem:[%s159 + $0x460] sm:$0xff]
      %v315 = vld [vmem:[%s159 + $0x468] sm:$0xff]
      %v316 = vld [vmem:[%s159 + $0x470] sm:$0xff]
      %v317 = vld [vmem:[%s159 + $0x478] sm:$0xff]
      %v318 = vld [vmem:[%s159 + $0x480] sm:$0xff]
      %v319 = vld [vmem:[%s159 + $0x488] sm:$0xff]
      %v320 = vld [vmem:[%s159 + $0x490] sm:$0xff]
      %v321 = vld [vmem:[%s159 + $0x498] sm:$0xff]
      %v322 = vld [vmem:[%s159 + $0x4a0] sm:$0xff]
      %v323 = vld [vmem:[%s159 + $0x4a8] sm:$0xff]
      %vm324 = vcmask 556032
      %v325 = vsel %vm324, %v175, 0.0
      %v326 = vadd.f32 %v174, %v325
      %327 = vadd.xlane.f32.xlu0 %v326
      %v328 = vpop.xlane.xlu0 %327
      %v329 = vsel %vm324, %v177, 0.0
      %v330 = vadd.f32 %v176, %v329
      %331 = vadd.xlane.f32.xlu0 %v330
      %v332 = vpop.xlane.xlu0 %331
      %v333 = vsel %vm324, %v179, 0.0
      %v334 = vadd.f32 %v178, %v333
      %335 = vadd.xlane.f32.xlu0 %v334
      %v336 = vpop.xlane.xlu0 %335
      %v337 = vsel %vm324, %v181, 0.0
      %v338 = vadd.f32 %v180, %v337
      %339 = vadd.xlane.f32.xlu0 %v338
      %v340 = vpop.xlane.xlu0 %339
      %v341 = vsel %vm324, %v183, 0.0
      %v342 = vadd.f32 %v182, %v341
      %343 = vadd.xlane.f32.xlu0 %v342
      %v344 = vpop.xlane.xlu0 %343
      %v345 = vsel %vm324, %v185, 0.0
      %v346 = vadd.f32 %v184, %v345
      %347 = vadd.xlane.f32.xlu0 %v346
      %v348 = vpop.xlane.xlu0 %347
      %v349 = vsel %vm324, %v187, 0.0
      %v350 = vadd.f32 %v186, %v349
      %351 = vadd.xlane.f32.xlu0 %v350
      %v352 = vpop.xlane.xlu0 %351
      %v353 = vsel %vm324, %v189, 0.0
      %v354 = vadd.f32 %v188, %v353
      %355 = vadd.xlane.f32.xlu0 %v354
      %v356 = vpop.xlane.xlu0 %355
      %v357 = vsel %vm324, %v191, 0.0
      %v358 = vadd.f32 %v190, %v357
      %359 = vadd.xlane.f32.xlu0 %v358
      %v360 = vpop.xlane.xlu0 %359
      %v361 = vsel %vm324, %v193, 0.0
      %v362 = vadd.f32 %v192, %v361
      %363 = vadd.xlane.f32.xlu0 %v362
      %v364 = vpop.xlane.xlu0 %363
      %v365 = vsel %vm324, %v195, 0.0
      %v366 = vadd.f32 %v194, %v365
      %367 = vadd.xlane.f32.xlu0 %v366
      %v368 = vpop.xlane.xlu0 %367
      %v369 = vsel %vm324, %v197, 0.0
      %v370 = vadd.f32 %v196, %v369
      %371 = vadd.xlane.f32.xlu0 %v370
      %v372 = vpop.xlane.xlu0 %371
      %v373 = vsel %vm324, %v199, 0.0
      %v374 = vadd.f32 %v198, %v373
      %375 = vadd.xlane.f32.xlu0 %v374
      %v376 = vpop.xlane.xlu0 %375
      %v377 = vsel %vm324, %v201, 0.0
      %v378 = vadd.f32 %v200, %v377
      %379 = vadd.xlane.f32.xlu0 %v378
      %v380 = vpop.xlane.xlu0 %379
      %v381 = vsel %vm324, %v203, 0.0
      %v382 = vadd.f32 %v202, %v381
      %383 = vadd.xlane.f32.xlu0 %v382
      %v384 = vpop.xlane.xlu0 %383
      %v385 = vsel %vm324, %v205, 0.0
      %v386 = vadd.f32 %v204, %v385
      %387 = vadd.xlane.f32.xlu0 %v386
      %v388 = vpop.xlane.xlu0 %387
      %v389 = vsel %vm324, %v207, 0.0
      %v390 = vadd.f32 %v206, %v389
      %391 = vadd.xlane.f32.xlu0 %v390
      %v392 = vpop.xlane.xlu0 %391
      %v393 = vsel %vm324, %v209, 0.0
      %v394 = vadd.f32 %v208, %v393
      %395 = vadd.xlane.f32.xlu0 %v394
      %v396 = vpop.xlane.xlu0 %395
      %v397 = vsel %vm324, %v211, 0.0
      %v398 = vadd.f32 %v210, %v397
      %399 = vadd.xlane.f32.xlu0 %v398
      %v400 = vpop.xlane.xlu0 %399
      %v401 = vsel %vm324, %v213, 0.0
      %v402 = vadd.f32 %v212, %v401
      %403 = vadd.xlane.f32.xlu0 %v402
      %v404 = vpop.xlane.xlu0 %403
      %v405 = vsel %vm324, %v215, 0.0
      %v406 = vadd.f32 %v214, %v405
      %407 = vadd.xlane.f32.xlu0 %v406
      %v408 = vpop.xlane.xlu0 %407
      %v409 = vsel %vm324, %v217, 0.0
      %v410 = vadd.f32 %v216, %v409
      %411 = vadd.xlane.f32.xlu0 %v410
      %v412 = vpop.xlane.xlu0 %411
      %v413 = vsel %vm324, %v219, 0.0
      %v414 = vadd.f32 %v218, %v413
      %415 = vadd.xlane.f32.xlu0 %v414
      %v416 = vpop.xlane.xlu0 %415
      %v417 = vsel %vm324, %v221, 0.0
      %v418 = vadd.f32 %v220, %v417
      %419 = vadd.xlane.f32.xlu0 %v418
      %v420 = vpop.xlane.xlu0 %419
      %v421 = vsel %vm324, %v223, 0.0
      %v422 = vadd.f32 %v222, %v421
      %423 = vadd.xlane.f32.xlu0 %v422
      %v424 = vpop.xlane.xlu0 %423
      %v425 = vsel %vm324, %v225, 0.0
      %v426 = vadd.f32 %v224, %v425
      %427 = vadd.xlane.f32.xlu0 %v426
      %v428 = vpop.xlane.xlu0 %427
      %v429 = vsel %vm324, %v227, 0.0
      %v430 = vadd.f32 %v226, %v429
      %431 = vadd.xlane.f32.xlu0 %v430
      %v432 = vpop.xlane.xlu0 %431
      %v433 = vsel %vm324, %v229, 0.0
      %v434 = vadd.f32 %v228, %v433
      %435 = vadd.xlane.f32.xlu0 %v434
      %v436 = vpop.xlane.xlu0 %435
      %v437 = vsel %vm324, %v231, 0.0
      %v438 = vadd.f32 %v230, %v437
      %439 = vadd.xlane.f32.xlu0 %v438
      %v440 = vpop.xlane.xlu0 %439
      %v441 = vsel %vm324, %v233, 0.0
      %v442 = vadd.f32 %v232, %v441
      %443 = vadd.xlane.f32.xlu0 %v442
      %v444 = vpop.xlane.xlu0 %443
      %v445 = vsel %vm324, %v235, 0.0
      %v446 = vadd.f32 %v234, %v445
      %447 = vadd.xlane.f32.xlu0 %v446
      %v448 = vpop.xlane.xlu0 %447
      %v449 = vsel %vm324, %v237, 0.0
      %v450 = vadd.f32 %v236, %v449
      %451 = vadd.xlane.f32.xlu0 %v450
      %v452 = vpop.xlane.xlu0 %451
      %v453 = vsel %vm324, %v239, 0.0
      %v454 = vadd.f32 %v238, %v453
      %455 = vadd.xlane.f32.xlu0 %v454
      %v456 = vpop.xlane.xlu0 %455
      %v457 = vsel %vm324, %v241, 0.0
      %v458 = vadd.f32 %v240, %v457
      %459 = vadd.xlane.f32.xlu0 %v458
      %v460 = vpop.xlane.xlu0 %459
      %v461 = vsel %vm324, %v243, 0.0
      %v462 = vadd.f32 %v242, %v461
      %463 = vadd.xlane.f32.xlu0 %v462
      %v464 = vpop.xlane.xlu0 %463
      %v465 = vsel %vm324, %v245, 0.0
      %v466 = vadd.f32 %v244, %v465
      %467 = vadd.xlane.f32.xlu0 %v466
      %v468 = vpop.xlane.xlu0 %467
      %v469 = vsel %vm324, %v247, 0.0
      %v470 = vadd.f32 %v246, %v469
      %471 = vadd.xlane.f32.xlu0 %v470
      %v472 = vpop.xlane.xlu0 %471
      %v473 = vsel %vm324, %v249, 0.0
      %v474 = vadd.f32 %v248, %v473
      %475 = vadd.xlane.f32.xlu0 %v474
      %v476 = vpop.xlane.xlu0 %475
      %v477 = vsel %vm324, %v251, 0.0
      %v478 = vadd.f32 %v250, %v477
      %479 = vadd.xlane.f32.xlu0 %v478
      %v480 = vpop.xlane.xlu0 %479
      %v481 = vsel %vm324, %v253, 0.0
      %v482 = vadd.f32 %v252, %v481
      %483 = vadd.xlane.f32.xlu0 %v482
      %v484 = vpop.xlane.xlu0 %483
      %v485 = vsel %vm324, %v255, 0.0
      %v486 = vadd.f32 %v254, %v485
      %487 = vadd.xlane.f32.xlu0 %v486
      %v488 = vpop.xlane.xlu0 %487
      %v489 = vsel %vm324, %v257, 0.0
      %v490 = vadd.f32 %v256, %v489
      %491 = vadd.xlane.f32.xlu0 %v490
      %v492 = vpop.xlane.xlu0 %491
      %v493 = vsel %vm324, %v259, 0.0
      %v494 = vadd.f32 %v258, %v493
      %495 = vadd.xlane.f32.xlu0 %v494
      %v496 = vpop.xlane.xlu0 %495
      %v497 = vsel %vm324, %v261, 0.0
      %v498 = vadd.f32 %v260, %v497
      %499 = vadd.xlane.f32.xlu0 %v498
      %v500 = vpop.xlane.xlu0 %499
      %v501 = vsel %vm324, %v263, 0.0
      %v502 = vadd.f32 %v262, %v501
      %503 = vadd.xlane.f32.xlu0 %v502
      %v504 = vpop.xlane.xlu0 %503
      %v505 = vsel %vm324, %v265, 0.0
      %v506 = vadd.f32 %v264, %v505
      %507 = vadd.xlane.f32.xlu0 %v506
      %v508 = vpop.xlane.xlu0 %507
      %v509 = vsel %vm324, %v267, 0.0
      %v510 = vadd.f32 %v266, %v509
      %511 = vadd.xlane.f32.xlu0 %v510
      %v512 = vpop.xlane.xlu0 %511
      %v513 = vsel %vm324, %v269, 0.0
      %v514 = vadd.f32 %v268, %v513
      %515 = vadd.xlane.f32.xlu0 %v514
      %v516 = vpop.xlane.xlu0 %515
      %v517 = vsel %vm324, %v271, 0.0
      %v518 = vadd.f32 %v270, %v517
      %519 = vadd.xlane.f32.xlu0 %v518
      %v520 = vpop.xlane.xlu0 %519
      %v521 = vsel %vm324, %v273, 0.0
      %v522 = vadd.f32 %v272, %v521
      %523 = vadd.xlane.f32.xlu0 %v522
      %v524 = vpop.xlane.xlu0 %523
      %v525 = vsel %vm324, %v275, 0.0
      %v526 = vadd.f32 %v274, %v525
      %527 = vadd.xlane.f32.xlu0 %v526
      %v528 = vpop.xlane.xlu0 %527
      %v529 = vsel %vm324, %v277, 0.0
      %v530 = vadd.f32 %v276, %v529
      %531 = vadd.xlane.f32.xlu0 %v530
      %v532 = vpop.xlane.xlu0 %531
      %v533 = vsel %vm324, %v279, 0.0
      %v534 = vadd.f32 %v278, %v533
      %535 = vadd.xlane.f32.xlu0 %v534
      %v536 = vpop.xlane.xlu0 %535
      %v537 = vsel %vm324, %v281, 0.0
      %v538 = vadd.f32 %v280, %v537
      %539 = vadd.xlane.f32.xlu0 %v538
      %v540 = vpop.xlane.xlu0 %539
      %v541 = vsel %vm324, %v283, 0.0
      %v542 = vadd.f32 %v282, %v541
      %543 = vadd.xlane.f32.xlu0 %v542
      %v544 = vpop.xlane.xlu0 %543
      %v545 = vsel %vm324, %v285, 0.0
      %v546 = vadd.f32 %v284, %v545
      %547 = vadd.xlane.f32.xlu0 %v546
      %v548 = vpop.xlane.xlu0 %547
      %v549 = vsel %vm324, %v287, 0.0
      %v550 = vadd.f32 %v286, %v549
      %551 = vadd.xlane.f32.xlu0 %v550
      %v552 = vpop.xlane.xlu0 %551
      %v553 = vsel %vm324, %v289, 0.0
      %v554 = vadd.f32 %v288, %v553
      %555 = vadd.xlane.f32.xlu0 %v554
      %v556 = vpop.xlane.xlu0 %555
      %v557 = vsel %vm324, %v291, 0.0
      %v558 = vadd.f32 %v290, %v557
      %559 = vadd.xlane.f32.xlu0 %v558
      %v560 = vpop.xlane.xlu0 %559
      %v561 = vsel %vm324, %v293, 0.0
      %v562 = vadd.f32 %v292, %v561
      %563 = vadd.xlane.f32.xlu0 %v562
      %v564 = vpop.xlane.xlu0 %563
      %v565 = vsel %vm324, %v295, 0.0
      %v566 = vadd.f32 %v294, %v565
      %567 = vadd.xlane.f32.xlu0 %v566
      %v568 = vpop.xlane.xlu0 %567
      %v569 = vsel %vm324, %v297, 0.0
      %v570 = vadd.f32 %v296, %v569
      %571 = vadd.xlane.f32.xlu0 %v570
      %v572 = vpop.xlane.xlu0 %571
      %v573 = vsel %vm324, %v299, 0.0
      %v574 = vadd.f32 %v298, %v573
      %575 = vadd.xlane.f32.xlu0 %v574
      %v576 = vpop.xlane.xlu0 %575
      %v577 = vsel %vm324, %v301, 0.0
      %v578 = vadd.f32 %v300, %v577
      %579 = vadd.xlane.f32.xlu0 %v578
      %v580 = vpop.xlane.xlu0 %579
      %v581 = vsel %vm324, %v303, 0.0
      %v582 = vadd.f32 %v302, %v581
      %583 = vadd.xlane.f32.xlu0 %v582
      %v584 = vpop.xlane.xlu0 %583
      %v585 = vsel %vm324, %v305, 0.0
      %v586 = vadd.f32 %v304, %v585
      %587 = vadd.xlane.f32.xlu0 %v586
      %v588 = vpop.xlane.xlu0 %587
      %v589 = vsel %vm324, %v307, 0.0
      %v590 = vadd.f32 %v306, %v589
      %591 = vadd.xlane.f32.xlu0 %v590
      %v592 = vpop.xlane.xlu0 %591
      %v593 = vsel %vm324, %v309, 0.0
      %v594 = vadd.f32 %v308, %v593
      %595 = vadd.xlane.f32.xlu0 %v594
      %v596 = vpop.xlane.xlu0 %595
      %v597 = vsel %vm324, %v311, 0.0
      %v598 = vadd.f32 %v310, %v597
      %599 = vadd.xlane.f32.xlu0 %v598
      %v600 = vpop.xlane.xlu0 %599
      %v601 = vsel %vm324, %v313, 0.0
      %v602 = vadd.f32 %v312, %v601
      %603 = vadd.xlane.f32.xlu0 %v602
      %v604 = vpop.xlane.xlu0 %603
      %v605 = vsel %vm324, %v315, 0.0
      %v606 = vadd.f32 %v314, %v605
      %607 = vadd.xlane.f32.xlu0 %v606
      %v608 = vpop.xlane.xlu0 %607
      %v609 = vsel %vm324, %v317, 0.0
      %v610 = vadd.f32 %v316, %v609
      %611 = vadd.xlane.f32.xlu0 %v610
      %v612 = vpop.xlane.xlu0 %611
      %v613 = vsel %vm324, %v319, 0.0
      %v614 = vadd.f32 %v318, %v613
      %615 = vadd.xlane.f32.xlu0 %v614
      %v616 = vpop.xlane.xlu0 %615
      %v617 = vsel %vm324, %v321, 0.0
      %v618 = vadd.f32 %v320, %v617
      %619 = vadd.xlane.f32.xlu0 %v618
      %v620 = vpop.xlane.xlu0 %619
      %v621 = vsel %vm324, %v323, 0.0
      %v622 = vadd.f32 %v322, %v621
      %623 = vadd.xlane.f32.xlu0 %v622
      %v624 = vpop.xlane.xlu0 %623
      %v625 = vmul.f32 %v174, %v174
      %v626 = vmul.f32 %v175, %v175
      %v627 = vmul.f32 %v176, %v176
      %v628 = vmul.f32 %v177, %v177
      %v629 = vmul.f32 %v178, %v178
      %v630 = vmul.f32 %v179, %v179
      %v631 = vmul.f32 %v180, %v180
      %v632 = vmul.f32 %v181, %v181
      %v633 = vmul.f32 %v182, %v182
      %v634 = vmul.f32 %v183, %v183
      %v635 = vmul.f32 %v184, %v184
      %v636 = vmul.f32 %v185, %v185
      %v637 = vmul.f32 %v186, %v186
      %v638 = vmul.f32 %v187, %v187
      %v639 = vmul.f32 %v188, %v188
      %v640 = vmul.f32 %v189, %v189
      %v641 = vmul.f32 %v190, %v190
      %v642 = vmul.f32 %v191, %v191
      %v643 = vmul.f32 %v192, %v192
      %v644 = vmul.f32 %v193, %v193
      %v645 = vmul.f32 %v194, %v194
      %v646 = vmul.f32 %v195, %v195
      %v647 = vmul.f32 %v196, %v196
      %v648 = vmul.f32 %v197, %v197
      %v649 = vmul.f32 %v198, %v198
      %v650 = vmul.f32 %v199, %v199
      %v651 = vmul.f32 %v200, %v200
      %v652 = vmul.f32 %v201, %v201
      %v653 = vmul.f32 %v202, %v202
      %v654 = vmul.f32 %v203, %v203
      %v655 = vmul.f32 %v204, %v204
      %v656 = vmul.f32 %v205, %v205
      %v657 = vmul.f32 %v206, %v206
      %v658 = vmul.f32 %v207, %v207
      %v659 = vmul.f32 %v208, %v208
      %v660 = vmul.f32 %v209, %v209
      %v661 = vmul.f32 %v210, %v210
      %v662 = vmul.f32 %v211, %v211
      %v663 = vmul.f32 %v212, %v212
      %v664 = vmul.f32 %v213, %v213
      %v665 = vmul.f32 %v214, %v214
      %v666 = vmul.f32 %v215, %v215
      %v667 = vmul.f32 %v216, %v216
      %v668 = vmul.f32 %v217, %v217
      %v669 = vmul.f32 %v218, %v218
      %v670 = vmul.f32 %v219, %v219
      %v671 = vmul.f32 %v220, %v220
      %v672 = vmul.f32 %v221, %v221
      %v673 = vmul.f32 %v222, %v222
      %v674 = vmul.f32 %v223, %v223
      %v675 = vmul.f32 %v224, %v224
      %v676 = vmul.f32 %v225, %v225
      %v677 = vmul.f32 %v226, %v226
      %v678 = vmul.f32 %v227, %v227
      %v679 = vmul.f32 %v228, %v228
      %v680 = vmul.f32 %v229, %v229
      %v681 = vmul.f32 %v230, %v230
      %v682 = vmul.f32 %v231, %v231
      %v683 = vmul.f32 %v232, %v232
      %v684 = vmul.f32 %v233, %v233
      %v685 = vmul.f32 %v234, %v234
      %v686 = vmul.f32 %v235, %v235
      %v687 = vmul.f32 %v236, %v236
      %v688 = vmul.f32 %v237, %v237
      %v689 = vmul.f32 %v238, %v238
      %v690 = vmul.f32 %v239, %v239
      %v691 = vmul.f32 %v240, %v240
      %v692 = vmul.f32 %v241, %v241
      %v693 = vmul.f32 %v242, %v242
      %v694 = vmul.f32 %v243, %v243
      %v695 = vmul.f32 %v244, %v244
      %v696 = vmul.f32 %v245, %v245
      %v697 = vmul.f32 %v246, %v246
      %v698 = vmul.f32 %v247, %v247
      %v699 = vmul.f32 %v248, %v248
      %v700 = vmul.f32 %v249, %v249
      %v701 = vmul.f32 %v250, %v250
      %v702 = vmul.f32 %v251, %v251
      %v703 = vmul.f32 %v252, %v252
      %v704 = vmul.f32 %v253, %v253
      %v705 = vmul.f32 %v254, %v254
      %v706 = vmul.f32 %v255, %v255
      %v707 = vmul.f32 %v256, %v256
      %v708 = vmul.f32 %v257, %v257
      %v709 = vmul.f32 %v258, %v258
      %v710 = vmul.f32 %v259, %v259
      %v711 = vmul.f32 %v260, %v260
      %v712 = vmul.f32 %v261, %v261
      %v713 = vmul.f32 %v262, %v262
      %v714 = vmul.f32 %v263, %v263
      %v715 = vmul.f32 %v264, %v264
      %v716 = vmul.f32 %v265, %v265
      %v717 = vmul.f32 %v266, %v266
      %v718 = vmul.f32 %v267, %v267
      %v719 = vmul.f32 %v268, %v268
      %v720 = vmul.f32 %v269, %v269
      %v721 = vmul.f32 %v270, %v270
      %v722 = vmul.f32 %v271, %v271
      %v723 = vmul.f32 %v272, %v272
      %v724 = vmul.f32 %v273, %v273
      %v725 = vmul.f32 %v274, %v274
      %v726 = vmul.f32 %v275, %v275
      %v727 = vmul.f32 %v276, %v276
      %v728 = vmul.f32 %v277, %v277
      %v729 = vmul.f32 %v278, %v278
      %v730 = vmul.f32 %v279, %v279
      %v731 = vmul.f32 %v280, %v280
      %v732 = vmul.f32 %v281, %v281
      %v733 = vmul.f32 %v282, %v282
      %v734 = vmul.f32 %v283, %v283
      %v735 = vmul.f32 %v284, %v284
      %v736 = vmul.f32 %v285, %v285
      %v737 = vmul.f32 %v286, %v286
      %v738 = vmul.f32 %v287, %v287
      %v739 = vmul.f32 %v288, %v288
      %v740 = vmul.f32 %v289, %v289
      %v741 = vmul.f32 %v290, %v290
      %v742 = vmul.f32 %v291, %v291
      %v743 = vmul.f32 %v292, %v292
      %v744 = vmul.f32 %v293, %v293
      %v745 = vmul.f32 %v294, %v294
      %v746 = vmul.f32 %v295, %v295
      %v747 = vmul.f32 %v296, %v296
      %v748 = vmul.f32 %v297, %v297
      %v749 = vmul.f32 %v298, %v298
      %v750 = vmul.f32 %v299, %v299
      %v751 = vmul.f32 %v300, %v300
      %v752 = vmul.f32 %v301, %v301
      %v753 = vmul.f32 %v302, %v302
      %v754 = vmul.f32 %v303, %v303
      %v755 = vmul.f32 %v304, %v304
      %v756 = vmul.f32 %v305, %v305
      %v757 = vmul.f32 %v306, %v306
      %v758 = vmul.f32 %v307, %v307
      %v759 = vmul.f32 %v308, %v308
      %v760 = vmul.f32 %v309, %v309
      %v761 = vmul.f32 %v310, %v310
      %v762 = vmul.f32 %v311, %v311
      %v763 = vmul.f32 %v312, %v312
      %v764 = vmul.f32 %v313, %v313
      %v765 = vmul.f32 %v314, %v314
      %v766 = vmul.f32 %v315, %v315
      %v767 = vmul.f32 %v316, %v316
      %v768 = vmul.f32 %v317, %v317
      %v769 = vmul.f32 %v318, %v318
      %v770 = vmul.f32 %v319, %v319
      %v771 = vmul.f32 %v320, %v320
      %v772 = vmul.f32 %v321, %v321
      %v773 = vmul.f32 %v322, %v322
      %v774 = vmul.f32 %v323, %v323
      %v775 = vsel %vm324, %v626, 0.0
      %v776 = vadd.f32 %v625, %v775
      %777 = vadd.xlane.f32.xlu0 %v776
      %v778 = vpop.xlane.xlu0 %777
      %v779 = vsel %vm324, %v628, 0.0
      %v780 = vadd.f32 %v627, %v779
      %781 = vadd.xlane.f32.xlu0 %v780
      %v782 = vpop.xlane.xlu0 %781
      %v783 = vsel %vm324, %v630, 0.0
      %v784 = vadd.f32 %v629, %v783
      %785 = vadd.xlane.f32.xlu0 %v784
      %v786 = vpop.xlane.xlu0 %785
      %v787 = vsel %vm324, %v632, 0.0
      %v788 = vadd.f32 %v631, %v787
      %789 = vadd.xlane.f32.xlu0 %v788
      %v790 = vpop.xlane.xlu0 %789
      %v791 = vsel %vm324, %v634, 0.0
      %v792 = vadd.f32 %v633, %v791
      %793 = vadd.xlane.f32.xlu0 %v792
      %v794 = vpop.xlane.xlu0 %793
      %v795 = vsel %vm324, %v636, 0.0
      %v796 = vadd.f32 %v635, %v795
      %797 = vadd.xlane.f32.xlu0 %v796
      %v798 = vpop.xlane.xlu0 %797
      %v799 = vsel %vm324, %v638, 0.0
      %v800 = vadd.f32 %v637, %v799
      %801 = vadd.xlane.f32.xlu0 %v800
      %v802 = vpop.xlane.xlu0 %801
      %v803 = vsel %vm324, %v640, 0.0
      %v804 = vadd.f32 %v639, %v803
      %805 = vadd.xlane.f32.xlu0 %v804
      %v806 = vpop.xlane.xlu0 %805
      %v807 = vsel %vm324, %v642, 0.0
      %v808 = vadd.f32 %v641, %v807
      %809 = vadd.xlane.f32.xlu0 %v808
      %v810 = vpop.xlane.xlu0 %809
      %v811 = vsel %vm324, %v644, 0.0
      %v812 = vadd.f32 %v643, %v811
      %813 = vadd.xlane.f32.xlu0 %v812
      %v814 = vpop.xlane.xlu0 %813
      %v815 = vsel %vm324, %v646, 0.0
      %v816 = vadd.f32 %v645, %v815
      %817 = vadd.xlane.f32.xlu0 %v816
      %v818 = vpop.xlane.xlu0 %817
      %v819 = vsel %vm324, %v648, 0.0
      %v820 = vadd.f32 %v647, %v819
      %821 = vadd.xlane.f32.xlu0 %v820
      %v822 = vpop.xlane.xlu0 %821
      %v823 = vsel %vm324, %v650, 0.0
      %v824 = vadd.f32 %v649, %v823
      %825 = vadd.xlane.f32.xlu0 %v824
      %v826 = vpop.xlane.xlu0 %825
      %v827 = vsel %vm324, %v652, 0.0
      %v828 = vadd.f32 %v651, %v827
      %829 = vadd.xlane.f32.xlu0 %v828
      %v830 = vpop.xlane.xlu0 %829
      %v831 = vsel %vm324, %v654, 0.0
      %v832 = vadd.f32 %v653, %v831
      %833 = vadd.xlane.f32.xlu0 %v832
      %v834 = vpop.xlane.xlu0 %833
      %v835 = vsel %vm324, %v656, 0.0
      %v836 = vadd.f32 %v655, %v835
      %837 = vadd.xlane.f32.xlu0 %v836
      %v838 = vpop.xlane.xlu0 %837
      %v839 = vsel %vm324, %v658, 0.0
      %v840 = vadd.f32 %v657, %v839
      %841 = vadd.xlane.f32.xlu0 %v840
      %v842 = vpop.xlane.xlu0 %841
      %v843 = vsel %vm324, %v660, 0.0
      %v844 = vadd.f32 %v659, %v843
      %845 = vadd.xlane.f32.xlu0 %v844
      %v846 = vpop.xlane.xlu0 %845
      %v847 = vsel %vm324, %v662, 0.0
      %v848 = vadd.f32 %v661, %v847
      %849 = vadd.xlane.f32.xlu0 %v848
      %v850 = vpop.xlane.xlu0 %849
      %v851 = vsel %vm324, %v664, 0.0
      %v852 = vadd.f32 %v663, %v851
      %853 = vadd.xlane.f32.xlu0 %v852
      %v854 = vpop.xlane.xlu0 %853
      %v855 = vsel %vm324, %v666, 0.0
      %v856 = vadd.f32 %v665, %v855
      %857 = vadd.xlane.f32.xlu0 %v856
      %v858 = vpop.xlane.xlu0 %857
      %v859 = vsel %vm324, %v668, 0.0
      %v860 = vadd.f32 %v667, %v859
      %861 = vadd.xlane.f32.xlu0 %v860
      %v862 = vpop.xlane.xlu0 %861
      %v863 = vsel %vm324, %v670, 0.0
      %v864 = vadd.f32 %v669, %v863
      %865 = vadd.xlane.f32.xlu0 %v864
      %v866 = vpop.xlane.xlu0 %865
      %v867 = vsel %vm324, %v672, 0.0
      %v868 = vadd.f32 %v671, %v867
      %869 = vadd.xlane.f32.xlu0 %v868
      %v870 = vpop.xlane.xlu0 %869
      %v871 = vsel %vm324, %v674, 0.0
      %v872 = vadd.f32 %v673, %v871
      %873 = vadd.xlane.f32.xlu0 %v872
      %v874 = vpop.xlane.xlu0 %873
      %v875 = vsel %vm324, %v676, 0.0
      %v876 = vadd.f32 %v675, %v875
      %877 = vadd.xlane.f32.xlu0 %v876
      %v878 = vpop.xlane.xlu0 %877
      %v879 = vsel %vm324, %v678, 0.0
      %v880 = vadd.f32 %v677, %v879
      %881 = vadd.xlane.f32.xlu0 %v880
      %v882 = vpop.xlane.xlu0 %881
      %v883 = vsel %vm324, %v680, 0.0
      %v884 = vadd.f32 %v679, %v883
      %885 = vadd.xlane.f32.xlu0 %v884
      %v886 = vpop.xlane.xlu0 %885
      %v887 = vsel %vm324, %v682, 0.0
      %v888 = vadd.f32 %v681, %v887
      %889 = vadd.xlane.f32.xlu0 %v888
      %v890 = vpop.xlane.xlu0 %889
      %v891 = vsel %vm324, %v684, 0.0
      %v892 = vadd.f32 %v683, %v891
      %893 = vadd.xlane.f32.xlu0 %v892
      %v894 = vpop.xlane.xlu0 %893
      %v895 = vsel %vm324, %v686, 0.0
      %v896 = vadd.f32 %v685, %v895
      %897 = vadd.xlane.f32.xlu0 %v896
      %v898 = vpop.xlane.xlu0 %897
      %v899 = vsel %vm324, %v688, 0.0
      %v900 = vadd.f32 %v687, %v899
      %901 = vadd.xlane.f32.xlu0 %v900
      %v902 = vpop.xlane.xlu0 %901
      %v903 = vsel %vm324, %v690, 0.0
      %v904 = vadd.f32 %v689, %v903
      %905 = vadd.xlane.f32.xlu0 %v904
      %v906 = vpop.xlane.xlu0 %905
      %v907 = vsel %vm324, %v692, 0.0
      %v908 = vadd.f32 %v691, %v907
      %909 = vadd.xlane.f32.xlu0 %v908
      %v910 = vpop.xlane.xlu0 %909
      %v911 = vsel %vm324, %v694, 0.0
      %v912 = vadd.f32 %v693, %v911
      %913 = vadd.xlane.f32.xlu0 %v912
      %v914 = vpop.xlane.xlu0 %913
      %v915 = vsel %vm324, %v696, 0.0
      %v916 = vadd.f32 %v695, %v915
      %917 = vadd.xlane.f32.xlu0 %v916
      %v918 = vpop.xlane.xlu0 %917
      %v919 = vsel %vm324, %v698, 0.0
      %v920 = vadd.f32 %v697, %v919
      %921 = vadd.xlane.f32.xlu0 %v920
      %v922 = vpop.xlane.xlu0 %921
      %v923 = vsel %vm324, %v700, 0.0
      %v924 = vadd.f32 %v699, %v923
      %925 = vadd.xlane.f32.xlu0 %v924
      %v926 = vpop.xlane.xlu0 %925
      %v927 = vsel %vm324, %v702, 0.0
      %v928 = vadd.f32 %v701, %v927
      %929 = vadd.xlane.f32.xlu0 %v928
      %v930 = vpop.xlane.xlu0 %929
      %v931 = vsel %vm324, %v704, 0.0
      %v932 = vadd.f32 %v703, %v931
      %933 = vadd.xlane.f32.xlu0 %v932
      %v934 = vpop.xlane.xlu0 %933
      %v935 = vsel %vm324, %v706, 0.0
      %v936 = vadd.f32 %v705, %v935
      %937 = vadd.xlane.f32.xlu0 %v936
      %v938 = vpop.xlane.xlu0 %937
      %v939 = vsel %vm324, %v708, 0.0
      %v940 = vadd.f32 %v707, %v939
      %941 = vadd.xlane.f32.xlu0 %v940
      %v942 = vpop.xlane.xlu0 %941
      %v943 = vsel %vm324, %v710, 0.0
      %v944 = vadd.f32 %v709, %v943
      %945 = vadd.xlane.f32.xlu0 %v944
      %v946 = vpop.xlane.xlu0 %945
      %v947 = vsel %vm324, %v712, 0.0
      %v948 = vadd.f32 %v711, %v947
      %949 = vadd.xlane.f32.xlu0 %v948
      %v950 = vpop.xlane.xlu0 %949
      %v951 = vsel %vm324, %v714, 0.0
      %v952 = vadd.f32 %v713, %v951
      %953 = vadd.xlane.f32.xlu0 %v952
      %v954 = vpop.xlane.xlu0 %953
      %v955 = vsel %vm324, %v716, 0.0
      %v956 = vadd.f32 %v715, %v955
      %957 = vadd.xlane.f32.xlu0 %v956
      %v958 = vpop.xlane.xlu0 %957
      %v959 = vsel %vm324, %v718, 0.0
      %v960 = vadd.f32 %v717, %v959
      %961 = vadd.xlane.f32.xlu0 %v960
      %v962 = vpop.xlane.xlu0 %961
      %v963 = vsel %vm324, %v720, 0.0
      %v964 = vadd.f32 %v719, %v963
      %965 = vadd.xlane.f32.xlu0 %v964
      %v966 = vpop.xlane.xlu0 %965
      %v967 = vsel %vm324, %v722, 0.0
      %v968 = vadd.f32 %v721, %v967
      %969 = vadd.xlane.f32.xlu0 %v968
      %v970 = vpop.xlane.xlu0 %969
      %v971 = vsel %vm324, %v724, 0.0
      %v972 = vadd.f32 %v723, %v971
      %973 = vadd.xlane.f32.xlu0 %v972
      %v974 = vpop.xlane.xlu0 %973
      %v975 = vsel %vm324, %v726, 0.0
      %v976 = vadd.f32 %v725, %v975
      %977 = vadd.xlane.f32.xlu0 %v976
      %v978 = vpop.xlane.xlu0 %977
      %v979 = vsel %vm324, %v728, 0.0
      %v980 = vadd.f32 %v727, %v979
      %981 = vadd.xlane.f32.xlu0 %v980
      %v982 = vpop.xlane.xlu0 %981
      %v983 = vsel %vm324, %v730, 0.0
      %v984 = vadd.f32 %v729, %v983
      %985 = vadd.xlane.f32.xlu0 %v984
      %v986 = vpop.xlane.xlu0 %985
      %v987 = vsel %vm324, %v732, 0.0
      %v988 = vadd.f32 %v731, %v987
      %989 = vadd.xlane.f32.xlu0 %v988
      %v990 = vpop.xlane.xlu0 %989
      %v991 = vsel %vm324, %v734, 0.0
      %v992 = vadd.f32 %v733, %v991
      %993 = vadd.xlane.f32.xlu0 %v992
      %v994 = vpop.xlane.xlu0 %993
      %v995 = vsel %vm324, %v736, 0.0
      %v996 = vadd.f32 %v735, %v995
      %997 = vadd.xlane.f32.xlu0 %v996
      %v998 = vpop.xlane.xlu0 %997
      %v999 = vsel %vm324, %v738, 0.0
      %v1000 = vadd.f32 %v737, %v999
      %1001 = vadd.xlane.f32.xlu0 %v1000
      %v1002 = vpop.xlane.xlu0 %1001
      %v1003 = vsel %vm324, %v740, 0.0
      %v1004 = vadd.f32 %v739, %v1003
      %1005 = vadd.xlane.f32.xlu0 %v1004
      %v1006 = vpop.xlane.xlu0 %1005
      %v1007 = vsel %vm324, %v742, 0.0
      %v1008 = vadd.f32 %v741, %v1007
      %1009 = vadd.xlane.f32.xlu0 %v1008
      %v1010 = vpop.xlane.xlu0 %1009
      %v1011 = vsel %vm324, %v744, 0.0
      %v1012 = vadd.f32 %v743, %v1011
      %1013 = vadd.xlane.f32.xlu0 %v1012
      %v1014 = vpop.xlane.xlu0 %1013
      %v1015 = vsel %vm324, %v746, 0.0
      %v1016 = vadd.f32 %v745, %v1015
      %1017 = vadd.xlane.f32.xlu0 %v1016
      %v1018 = vpop.xlane.xlu0 %1017
      %v1019 = vsel %vm324, %v748, 0.0
      %v1020 = vadd.f32 %v747, %v1019
      %1021 = vadd.xlane.f32.xlu0 %v1020
      %v1022 = vpop.xlane.xlu0 %1021
      %v1023 = vsel %vm324, %v750, 0.0
      %v1024 = vadd.f32 %v749, %v1023
      %1025 = vadd.xlane.f32.xlu0 %v1024
      %v1026 = vpop.xlane.xlu0 %1025
      %v1027 = vsel %vm324, %v752, 0.0
      %v1028 = vadd.f32 %v751, %v1027
      %1029 = vadd.xlane.f32.xlu0 %v1028
      %v1030 = vpop.xlane.xlu0 %1029
      %v1031 = vsel %vm324, %v754, 0.0
      %v1032 = vadd.f32 %v753, %v1031
      %1033 = vadd.xlane.f32.xlu0 %v1032
      %v1034 = vpop.xlane.xlu0 %1033
      %v1035 = vsel %vm324, %v756, 0.0
      %v1036 = vadd.f32 %v755, %v1035
      %1037 = vadd.xlane.f32.xlu0 %v1036
      %v1038 = vpop.xlane.xlu0 %1037
      %v1039 = vsel %vm324, %v758, 0.0
      %v1040 = vadd.f32 %v757, %v1039
      %1041 = vadd.xlane.f32.xlu0 %v1040
      %v1042 = vpop.xlane.xlu0 %1041
      %v1043 = vsel %vm324, %v760, 0.0
      %v1044 = vadd.f32 %v759, %v1043
      %1045 = vadd.xlane.f32.xlu0 %v1044
      %v1046 = vpop.xlane.xlu0 %1045
      %v1047 = vsel %vm324, %v762, 0.0
      %v1048 = vadd.f32 %v761, %v1047
      %1049 = vadd.xlane.f32.xlu0 %v1048
      %v1050 = vpop.xlane.xlu0 %1049
      %v1051 = vsel %vm324, %v764, 0.0
      %v1052 = vadd.f32 %v763, %v1051
      %1053 = vadd.xlane.f32.xlu0 %v1052
      %v1054 = vpop.xlane.xlu0 %1053
      %v1055 = vsel %vm324, %v766, 0.0
      %v1056 = vadd.f32 %v765, %v1055
      %1057 = vadd.xlane.f32.xlu0 %v1056
      %v1058 = vpop.xlane.xlu0 %1057
      %v1059 = vsel %vm324, %v768, 0.0
      %v1060 = vadd.f32 %v767, %v1059
      %1061 = vadd.xlane.f32.xlu0 %v1060
      %v1062 = vpop.xlane.xlu0 %1061
      %v1063 = vsel %vm324, %v770, 0.0
      %v1064 = vadd.f32 %v769, %v1063
      %1065 = vadd.xlane.f32.xlu0 %v1064
      %v1066 = vpop.xlane.xlu0 %1065
      %v1067 = vsel %vm324, %v772, 0.0
      %v1068 = vadd.f32 %v771, %v1067
      %1069 = vadd.xlane.f32.xlu0 %v1068
      %v1070 = vpop.xlane.xlu0 %1069
      %v1071 = vsel %vm324, %v774, 0.0
      %v1072 = vadd.f32 %v773, %v1071
      %1073 = vadd.xlane.f32.xlu0 %v1072
      %v1074 = vpop.xlane.xlu0 %1073
      %v1075 = vmul.f32 %v328, 0.0051020407
      %v1076 = vmul.f32 %v332, 0.0051020407
      %v1077 = vmul.f32 %v336, 0.0051020407
      %v1078 = vmul.f32 %v340, 0.0051020407
      %v1079 = vmul.f32 %v344, 0.0051020407
      %v1080 = vmul.f32 %v348, 0.0051020407
      %v1081 = vmul.f32 %v352, 0.0051020407
      %v1082 = vmul.f32 %v356, 0.0051020407
      %v1083 = vmul.f32 %v360, 0.0051020407
      %v1084 = vmul.f32 %v364, 0.0051020407
      %v1085 = vmul.f32 %v368, 0.0051020407
      %v1086 = vmul.f32 %v372, 0.0051020407
      %v1087 = vmul.f32 %v376, 0.0051020407
      %v1088 = vmul.f32 %v380, 0.0051020407
      %v1089 = vmul.f32 %v384, 0.0051020407
      %v1090 = vmul.f32 %v388, 0.0051020407
      %v1091 = vmul.f32 %v392, 0.0051020407
      %v1092 = vmul.f32 %v396, 0.0051020407
      %v1093 = vmul.f32 %v400, 0.0051020407
      %v1094 = vmul.f32 %v404, 0.0051020407
      %v1095 = vmul.f32 %v408, 0.0051020407
      %v1096 = vmul.f32 %v412, 0.0051020407
      %v1097 = vmul.f32 %v416, 0.0051020407
      %v1098 = vmul.f32 %v420, 0.0051020407
      %v1099 = vmul.f32 %v424, 0.0051020407
      %v1100 = vmul.f32 %v428, 0.0051020407
      %v1101 = vmul.f32 %v432, 0.0051020407
      %v1102 = vmul.f32 %v436, 0.0051020407
      %v1103 = vmul.f32 %v440, 0.0051020407
      %v1104 = vmul.f32 %v444, 0.0051020407
      %v1105 = vmul.f32 %v448, 0.0051020407
      %v1106 = vmul.f32 %v452, 0.0051020407
      %v1107 = vmul.f32 %v456, 0.0051020407
      %v1108 = vmul.f32 %v460, 0.0051020407
      %v1109 = vmul.f32 %v464, 0.0051020407
      %v1110 = vmul.f32 %v468, 0.0051020407
      %v1111 = vmul.f32 %v472, 0.0051020407
      %v1112 = vmul.f32 %v476, 0.0051020407
      %v1113 = vmul.f32 %v480, 0.0051020407
      %v1114 = vmul.f32 %v484, 0.0051020407
      %v1115 = vmul.f32 %v488, 0.0051020407
      %v1116 = vmul.f32 %v492, 0.0051020407
      %v1117 = vmul.f32 %v496, 0.0051020407
      %v1118 = vmul.f32 %v500, 0.0051020407
      %v1119 = vmul.f32 %v504, 0.0051020407
      %v1120 = vmul.f32 %v508, 0.0051020407
      %v1121 = vmul.f32 %v512, 0.0051020407
      %v1122 = vmul.f32 %v516, 0.0051020407
      %v1123 = vmul.f32 %v520, 0.0051020407
      %v1124 = vmul.f32 %v524, 0.0051020407
      %v1125 = vmul.f32 %v528, 0.0051020407
      %v1126 = vmul.f32 %v532, 0.0051020407
      %v1127 = vmul.f32 %v536, 0.0051020407
      %v1128 = vmul.f32 %v540, 0.0051020407
      %v1129 = vmul.f32 %v544, 0.0051020407
      %v1130 = vmul.f32 %v548, 0.0051020407
      %v1131 = vmul.f32 %v552, 0.0051020407
      %v1132 = vmul.f32 %v556, 0.0051020407
      %v1133 = vmul.f32 %v560, 0.0051020407
      %v1134 = vmul.f32 %v564, 0.0051020407
      %v1135 = vmul.f32 %v568, 0.0051020407
      %v1136 = vmul.f32 %v572, 0.0051020407
      %v1137 = vmul.f32 %v576, 0.0051020407
      %v1138 = vmul.f32 %v580, 0.0051020407
      %v1139 = vmul.f32 %v584, 0.0051020407
      %v1140 = vmul.f32 %v588, 0.0051020407
      %v1141 = vmul.f32 %v592, 0.0051020407
      %v1142 = vmul.f32 %v596, 0.0051020407
      %v1143 = vmul.f32 %v600, 0.0051020407
      %v1144 = vmul.f32 %v604, 0.0051020407
      %v1145 = vmul.f32 %v608, 0.0051020407
      %v1146 = vmul.f32 %v612, 0.0051020407
      %v1147 = vmul.f32 %v616, 0.0051020407
      %v1148 = vmul.f32 %v620, 0.0051020407
      %v1149 = vmul.f32 %v624, 0.0051020407
      %v1150 = vmul.f32 %v778, 0.0051020407
      %v1151 = vmul.f32 %v782, 0.0051020407
      %v1152 = vmul.f32 %v786, 0.0051020407
      %v1153 = vmul.f32 %v790, 0.0051020407
      %v1154 = vmul.f32 %v794, 0.0051020407
      %v1155 = vmul.f32 %v798, 0.0051020407
      %v1156 = vmul.f32 %v802, 0.0051020407
      %v1157 = vmul.f32 %v806, 0.0051020407
      %v1158 = vmul.f32 %v810, 0.0051020407
      %v1159 = vmul.f32 %v814, 0.0051020407
      %v1160 = vmul.f32 %v818, 0.0051020407
      %v1161 = vmul.f32 %v822, 0.0051020407
      %v1162 = vmul.f32 %v826, 0.0051020407
      %v1163 = vmul.f32 %v830, 0.0051020407
      %v1164 = vmul.f32 %v834, 0.0051020407
      %v1165 = vmul.f32 %v838, 0.0051020407
      %v1166 = vmul.f32 %v842, 0.0051020407
      %v1167 = vmul.f32 %v846, 0.0051020407
      %v1168 = vmul.f32 %v850, 0.0051020407
      %v1169 = vmul.f32 %v854, 0.0051020407
      %v1170 = vmul.f32 %v858, 0.0051020407
      %v1171 = vmul.f32 %v862, 0.0051020407
      %v1172 = vmul.f32 %v866, 0.0051020407
      %v1173 = vmul.f32 %v870, 0.0051020407
      %v1174 = vmul.f32 %v874, 0.0051020407
      %v1175 = vmul.f32 %v878, 0.0051020407
      %v1176 = vmul.f32 %v882, 0.0051020407
      %v1177 = vmul.f32 %v886, 0.0051020407
      %v1178 = vmul.f32 %v890, 0.0051020407
      %v1179 = vmul.f32 %v894, 0.0051020407
      %v1180 = vmul.f32 %v898, 0.0051020407
      %v1181 = vmul.f32 %v902, 0.0051020407
      %v1182 = vmul.f32 %v906, 0.0051020407
      %v1183 = vmul.f32 %v910, 0.0051020407
      %v1184 = vmul.f32 %v914, 0.0051020407
      %v1185 = vmul.f32 %v918, 0.0051020407
      %v1186 = vmul.f32 %v922, 0.0051020407
      %v1187 = vmul.f32 %v926, 0.0051020407
      %v1188 = vmul.f32 %v930, 0.0051020407
      %v1189 = vmul.f32 %v934, 0.0051020407
      %v1190 = vmul.f32 %v938, 0.0051020407
      %v1191 = vmul.f32 %v942, 0.0051020407
      %v1192 = vmul.f32 %v946, 0.0051020407
      %v1193 = vmul.f32 %v950, 0.0051020407
      %v1194 = vmul.f32 %v954, 0.0051020407
      %v1195 = vmul.f32 %v958, 0.0051020407
      %v1196 = vmul.f32 %v962, 0.0051020407
      %v1197 = vmul.f32 %v966, 0.0051020407
      %v1198 = vmul.f32 %v970, 0.0051020407
      %v1199 = vmul.f32 %v974, 0.0051020407
      %v1200 = vmul.f32 %v978, 0.0051020407
      %v1201 = vmul.f32 %v982, 0.0051020407
      %v1202 = vmul.f32 %v986, 0.0051020407
      %v1203 = vmul.f32 %v990, 0.0051020407
      %v1204 = vmul.f32 %v994, 0.0051020407
      %v1205 = vmul.f32 %v998, 0.0051020407
      %v1206 = vmul.f32 %v1002, 0.0051020407
      %v1207 = vmul.f32 %v1006, 0.0051020407
      %v1208 = vmul.f32 %v1010, 0.0051020407
      %v1209 = vmul.f32 %v1014, 0.0051020407
      %v1210 = vmul.f32 %v1018, 0.0051020407
      %v1211 = vmul.f32 %v1022, 0.0051020407
      %v1212 = vmul.f32 %v1026, 0.0051020407
      %v1213 = vmul.f32 %v1030, 0.0051020407
      %v1214 = vmul.f32 %v1034, 0.0051020407
      %v1215 = vmul.f32 %v1038, 0.0051020407
      %v1216 = vmul.f32 %v1042, 0.0051020407
      %v1217 = vmul.f32 %v1046, 0.0051020407
      %v1218 = vmul.f32 %v1050, 0.0051020407
      %v1219 = vmul.f32 %v1054, 0.0051020407
      %v1220 = vmul.f32 %v1058, 0.0051020407
      %v1221 = vmul.f32 %v1062, 0.0051020407
      %v1222 = vmul.f32 %v1066, 0.0051020407
      %v1223 = vmul.f32 %v1070, 0.0051020407
      %v1224 = vmul.f32 %v1074, 0.0051020407
      %v1225 = vmul.f32 %v1075, %v1075
      %v1226 = vmul.f32 %v1076, %v1076
      %v1227 = vmul.f32 %v1077, %v1077
      %v1228 = vmul.f32 %v1078, %v1078
      %v1229 = vmul.f32 %v1079, %v1079
      %v1230 = vmul.f32 %v1080, %v1080
      %v1231 = vmul.f32 %v1081, %v1081
      %v1232 = vmul.f32 %v1082, %v1082
      %v1233 = vmul.f32 %v1083, %v1083
      %v1234 = vmul.f32 %v1084, %v1084
      %v1235 = vmul.f32 %v1085, %v1085
      %v1236 = vmul.f32 %v1086, %v1086
      %v1237 = vmul.f32 %v1087, %v1087
      %v1238 = vmul.f32 %v1088, %v1088
      %v1239 = vmul.f32 %v1089, %v1089
      %v1240 = vmul.f32 %v1090, %v1090
      %v1241 = vmul.f32 %v1091, %v1091
      %v1242 = vmul.f32 %v1092, %v1092
      %v1243 = vmul.f32 %v1093, %v1093
      %v1244 = vmul.f32 %v1094, %v1094
      %v1245 = vmul.f32 %v1095, %v1095
      %v1246 = vmul.f32 %v1096, %v1096
      %v1247 = vmul.f32 %v1097, %v1097
      %v1248 = vmul.f32 %v1098, %v1098
      %v1249 = vmul.f32 %v1099, %v1099
      %v1250 = vmul.f32 %v1100, %v1100
      %v1251 = vmul.f32 %v1101, %v1101
      %v1252 = vmul.f32 %v1102, %v1102
      %v1253 = vmul.f32 %v1103, %v1103
      %v1254 = vmul.f32 %v1104, %v1104
      %v1255 = vmul.f32 %v1105, %v1105
      %v1256 = vmul.f32 %v1106, %v1106
      %v1257 = vmul.f32 %v1107, %v1107
      %v1258 = vmul.f32 %v1108, %v1108
      %v1259 = vmul.f32 %v1109, %v1109
      %v1260 = vmul.f32 %v1110, %v1110
      %v1261 = vmul.f32 %v1111, %v1111
      %v1262 = vmul.f32 %v1112, %v1112
      %v1263 = vmul.f32 %v1113, %v1113
      %v1264 = vmul.f32 %v1114, %v1114
      %v1265 = vmul.f32 %v1115, %v1115
      %v1266 = vmul.f32 %v1116, %v1116
      %v1267 = vmul.f32 %v1117, %v1117
      %v1268 = vmul.f32 %v1118, %v1118
      %v1269 = vmul.f32 %v1119, %v1119
      %v1270 = vmul.f32 %v1120, %v1120
      %v1271 = vmul.f32 %v1121, %v1121
      %v1272 = vmul.f32 %v1122, %v1122
      %v1273 = vmul.f32 %v1123, %v1123
      %v1274 = vmul.f32 %v1124, %v1124
      %v1275 = vmul.f32 %v1125, %v1125
      %v1276 = vmul.f32 %v1126, %v1126
      %v1277 = vmul.f32 %v1127, %v1127
      %v1278 = vmul.f32 %v1128, %v1128
      %v1279 = vmul.f32 %v1129, %v1129
      %v1280 = vmul.f32 %v1130, %v1130
      %v1281 = vmul.f32 %v1131, %v1131
      %v1282 = vmul.f32 %v1132, %v1132
      %v1283 = vmul.f32 %v1133, %v1133
      %v1284 = vmul.f32 %v1134, %v1134
      %v1285 = vmul.f32 %v1135, %v1135
      %v1286 = vmul.f32 %v1136, %v1136
      %v1287 = vmul.f32 %v1137, %v1137
      %v1288 = vmul.f32 %v1138, %v1138
      %v1289 = vmul.f32 %v1139, %v1139
      %v1290 = vmul.f32 %v1140, %v1140
      %v1291 = vmul.f32 %v1141, %v1141
      %v1292 = vmul.f32 %v1142, %v1142
      %v1293 = vmul.f32 %v1143, %v1143
      %v1294 = vmul.f32 %v1144, %v1144
      %v1295 = vmul.f32 %v1145, %v1145
      %v1296 = vmul.f32 %v1146, %v1146
      %v1297 = vmul.f32 %v1147, %v1147
      %v1298 = vmul.f32 %v1148, %v1148
      %v1299 = vmul.f32 %v1149, %v1149
      %v1300 = vsub.f32 %v1150, %v1225
      %v1301 = vsub.f32 %v1151, %v1226
      %v1302 = vsub.f32 %v1152, %v1227
      %v1303 = vsub.f32 %v1153, %v1228
      %v1304 = vsub.f32 %v1154, %v1229
      %v1305 = vsub.f32 %v1155, %v1230
      %v1306 = vsub.f32 %v1156, %v1231
      %v1307 = vsub.f32 %v1157, %v1232
      %v1308 = vsub.f32 %v1158, %v1233
      %v1309 = vsub.f32 %v1159, %v1234
      %v1310 = vsub.f32 %v1160, %v1235
      %v1311 = vsub.f32 %v1161, %v1236
      %v1312 = vsub.f32 %v1162, %v1237
      %v1313 = vsub.f32 %v1163, %v1238
      %v1314 = vsub.f32 %v1164, %v1239
      %v1315 = vsub.f32 %v1165, %v1240
      %v1316 = vsub.f32 %v1166, %v1241
      %v1317 = vsub.f32 %v1167, %v1242
      %v1318 = vsub.f32 %v1168, %v1243
      %v1319 = vsub.f32 %v1169, %v1244
      %v1320 = vsub.f32 %v1170, %v1245
      %v1321 = vsub.f32 %v1171, %v1246
      %v1322 = vsub.f32 %v1172, %v1247
      %v1323 = vsub.f32 %v1173, %v1248
      %v1324 = vsub.f32 %v1174, %v1249
      %v1325 = vsub.f32 %v1175, %v1250
      %v1326 = vsub.f32 %v1176, %v1251
      %v1327 = vsub.f32 %v1177, %v1252
      %v1328 = vsub.f32 %v1178, %v1253
      %v1329 = vsub.f32 %v1179, %v1254
      %v1330 = vsub.f32 %v1180, %v1255
      %v1331 = vsub.f32 %v1181, %v1256
      %v1332 = vsub.f32 %v1182, %v1257
      %v1333 = vsub.f32 %v1183, %v1258
      %v1334 = vsub.f32 %v1184, %v1259
      %v1335 = vsub.f32 %v1185, %v1260
      %v1336 = vsub.f32 %v1186, %v1261
      %v1337 = vsub.f32 %v1187, %v1262
      %v1338 = vsub.f32 %v1188, %v1263
      %v1339 = vsub.f32 %v1189, %v1264
      %v1340 = vsub.f32 %v1190, %v1265
      %v1341 = vsub.f32 %v1191, %v1266
      %v1342 = vsub.f32 %v1192, %v1267
      %v1343 = vsub.f32 %v1193, %v1268
      %v1344 = vsub.f32 %v1194, %v1269
      %v1345 = vsub.f32 %v1195, %v1270
      %v1346 = vsub.f32 %v1196, %v1271
      %v1347 = vsub.f32 %v1197, %v1272
      %v1348 = vsub.f32 %v1198, %v1273
      %v1349 = vsub.f32 %v1199, %v1274
      %v1350 = vsub.f32 %v1200, %v1275
      %v1351 = vsub.f32 %v1201, %v1276
      %v1352 = vsub.f32 %v1202, %v1277
      %v1353 = vsub.f32 %v1203, %v1278
      %v1354 = vsub.f32 %v1204, %v1279
      %v1355 = vsub.f32 %v1205, %v1280
      %v1356 = vsub.f32 %v1206, %v1281
      %v1357 = vsub.f32 %v1207, %v1282
      %v1358 = vsub.f32 %v1208, %v1283
      %v1359 = vsub.f32 %v1209, %v1284
      %v1360 = vsub.f32 %v1210, %v1285
      %v1361 = vsub.f32 %v1211, %v1286
      %v1362 = vsub.f32 %v1212, %v1287
      %v1363 = vsub.f32 %v1213, %v1288
      %v1364 = vsub.f32 %v1214, %v1289
      %v1365 = vsub.f32 %v1215, %v1290
      %v1366 = vsub.f32 %v1216, %v1291
      %v1367 = vsub.f32 %v1217, %v1292
      %v1368 = vsub.f32 %v1218, %v1293
      %v1369 = vsub.f32 %v1219, %v1294
      %v1370 = vsub.f32 %v1220, %v1295
      %v1371 = vsub.f32 %v1221, %v1296
      %v1372 = vsub.f32 %v1222, %v1297
      %v1373 = vsub.f32 %v1223, %v1298
      %v1374 = vsub.f32 %v1224, %v1299
      %v1375 = vadd.f32 %v1300, 0.001
      %v1376 = vadd.f32 %v1301, 0.001
      %v1377 = vadd.f32 %v1302, 0.001
      %v1378 = vadd.f32 %v1303, 0.001
      %v1379 = vadd.f32 %v1304, 0.001
      %v1380 = vadd.f32 %v1305, 0.001
      %v1381 = vadd.f32 %v1306, 0.001
      %v1382 = vadd.f32 %v1307, 0.001
      %v1383 = vadd.f32 %v1308, 0.001
      %v1384 = vadd.f32 %v1309, 0.001
      %v1385 = vadd.f32 %v1310, 0.001
      %v1386 = vadd.f32 %v1311, 0.001
      %v1387 = vadd.f32 %v1312, 0.001
      %v1388 = vadd.f32 %v1313, 0.001
      %v1389 = vadd.f32 %v1314, 0.001
      %v1390 = vadd.f32 %v1315, 0.001
      %v1391 = vadd.f32 %v1316, 0.001
      %v1392 = vadd.f32 %v1317, 0.001
      %v1393 = vadd.f32 %v1318, 0.001
      %v1394 = vadd.f32 %v1319, 0.001
      %v1395 = vadd.f32 %v1320, 0.001
      %v1396 = vadd.f32 %v1321, 0.001
      %v1397 = vadd.f32 %v1322, 0.001
      %v1398 = vadd.f32 %v1323, 0.001
      %v1399 = vadd.f32 %v1324, 0.001
      %v1400 = vadd.f32 %v1325, 0.001
      %v1401 = vadd.f32 %v1326, 0.001
      %v1402 = vadd.f32 %v1327, 0.001
      %v1403 = vadd.f32 %v1328, 0.001
      %v1404 = vadd.f32 %v1329, 0.001
      %v1405 = vadd.f32 %v1330, 0.001
      %v1406 = vadd.f32 %v1331, 0.001
      %v1407 = vadd.f32 %v1332, 0.001
      %v1408 = vadd.f32 %v1333, 0.001
      %v1409 = vadd.f32 %v1334, 0.001
      %v1410 = vadd.f32 %v1335, 0.001
      %v1411 = vadd.f32 %v1336, 0.001
      %v1412 = vadd.f32 %v1337, 0.001
      %v1413 = vadd.f32 %v1338, 0.001
      %v1414 = vadd.f32 %v1339, 0.001
      %v1415 = vadd.f32 %v1340, 0.001
      %v1416 = vadd.f32 %v1341, 0.001
      %v1417 = vadd.f32 %v1342, 0.001
      %v1418 = vadd.f32 %v1343, 0.001
      %v1419 = vadd.f32 %v1344, 0.001
      %v1420 = vadd.f32 %v1345, 0.001
      %v1421 = vadd.f32 %v1346, 0.001
      %v1422 = vadd.f32 %v1347, 0.001
      %v1423 = vadd.f32 %v1348, 0.001
      %v1424 = vadd.f32 %v1349, 0.001
      %v1425 = vadd.f32 %v1350, 0.001
      %v1426 = vadd.f32 %v1351, 0.001
      %v1427 = vadd.f32 %v1352, 0.001
      %v1428 = vadd.f32 %v1353, 0.001
      %v1429 = vadd.f32 %v1354, 0.001
      %v1430 = vadd.f32 %v1355, 0.001
      %v1431 = vadd.f32 %v1356, 0.001
      %v1432 = vadd.f32 %v1357, 0.001
      %v1433 = vadd.f32 %v1358, 0.001
      %v1434 = vadd.f32 %v1359, 0.001
      %v1435 = vadd.f32 %v1360, 0.001
      %v1436 = vadd.f32 %v1361, 0.001
      %v1437 = vadd.f32 %v1362, 0.001
      %v1438 = vadd.f32 %v1363, 0.001
      %v1439 = vadd.f32 %v1364, 0.001
      %v1440 = vadd.f32 %v1365, 0.001
      %v1441 = vadd.f32 %v1366, 0.001
      %v1442 = vadd.f32 %v1367, 0.001
      %v1443 = vadd.f32 %v1368, 0.001
      %v1444 = vadd.f32 %v1369, 0.001
      %v1445 = vadd.f32 %v1370, 0.001
      %v1446 = vadd.f32 %v1371, 0.001
      %v1447 = vadd.f32 %v1372, 0.001
      %v1448 = vadd.f32 %v1373, 0.001
      %v1449 = vadd.f32 %v1374, 0.001
      %v1450 = vrsqrt.pop %v1375
      %v1451 = vrsqrt.pop %v1376
      %v1452 = vrsqrt.pop %v1377
      %v1453 = vrsqrt.pop %v1378
      %v1454 = vrsqrt.pop %v1379
      %v1455 = vrsqrt.pop %v1380
      %v1456 = vrsqrt.pop %v1381
      %v1457 = vrsqrt.pop %v1382
      %v1458 = vrsqrt.pop %v1383
      %v1459 = vrsqrt.pop %v1384
      %v1460 = vrsqrt.pop %v1385
      %v1461 = vrsqrt.pop %v1386
      %v1462 = vrsqrt.pop %v1387
      %v1463 = vrsqrt.pop %v1388
      %v1464 = vrsqrt.pop %v1389
      %v1465 = vrsqrt.pop %v1390
      %v1466 = vrsqrt.pop %v1391
      %v1467 = vrsqrt.pop %v1392
      %v1468 = vrsqrt.pop %v1393
      %v1469 = vrsqrt.pop %v1394
      %v1470 = vrsqrt.pop %v1395
      %v1471 = vrsqrt.pop %v1396
      %v1472 = vrsqrt.pop %v1397
      %v1473 = vrsqrt.pop %v1398
      %v1474 = vrsqrt.pop %v1399
      %v1475 = vrsqrt.pop %v1400
      %v1476 = vrsqrt.pop %v1401
      %v1477 = vrsqrt.pop %v1402
      %v1478 = vrsqrt.pop %v1403
      %v1479 = vrsqrt.pop %v1404
      %v1480 = vrsqrt.pop %v1405
      %v1481 = vrsqrt.pop %v1406
      %v1482 = vrsqrt.pop %v1407
      %v1483 = vrsqrt.pop %v1408
      %v1484 = vrsqrt.pop %v1409
      %v1485 = vrsqrt.pop %v1410
      %v1486 = vrsqrt.pop %v1411
      %v1487 = vrsqrt.pop %v1412
      %v1488 = vrsqrt.pop %v1413
      %v1489 = vrsqrt.pop %v1414
      %v1490 = vrsqrt.pop %v1415
      %v1491 = vrsqrt.pop %v1416
      %v1492 = vrsqrt.pop %v1417
      %v1493 = vrsqrt.pop %v1418
      %v1494 = vrsqrt.pop %v1419
      %v1495 = vrsqrt.pop %v1420
      %v1496 = vrsqrt.pop %v1421
      %v1497 = vrsqrt.pop %v1422
      %v1498 = vrsqrt.pop %v1423
      %v1499 = vrsqrt.pop %v1424
      %v1500 = vrsqrt.pop %v1425
      %v1501 = vrsqrt.pop %v1426
      %v1502 = vrsqrt.pop %v1427
      %v1503 = vrsqrt.pop %v1428
      %v1504 = vrsqrt.pop %v1429
      %v1505 = vrsqrt.pop %v1430
      %v1506 = vrsqrt.pop %v1431
      %v1507 = vrsqrt.pop %v1432
      %v1508 = vrsqrt.pop %v1433
      %v1509 = vrsqrt.pop %v1434
      %v1510 = vrsqrt.pop %v1435
      %v1511 = vrsqrt.pop %v1436
      %v1512 = vrsqrt.pop %v1437
      %v1513 = vrsqrt.pop %v1438
      %v1514 = vrsqrt.pop %v1439
      %v1515 = vrsqrt.pop %v1440
      %v1516 = vrsqrt.pop %v1441
      %v1517 = vrsqrt.pop %v1442
      %v1518 = vrsqrt.pop %v1443
      %v1519 = vrsqrt.pop %v1444
      %v1520 = vrsqrt.pop %v1445
      %v1521 = vrsqrt.pop %v1446
      %v1522 = vrsqrt.pop %v1447
      %v1523 = vrsqrt.pop %v1448
      %v1524 = vrsqrt.pop %v1449
      %v1525 = vld [vmem:[%s165] sm:$0xff]
      %v1526 = vld [vmem:[%s165 + $0x8] sm:$0xff]
      %v1527 = vld [vmem:[%s165 + $0x10] sm:$0xff]
      %v1528 = vld [vmem:[%s165 + $0x18] sm:$0xff]
      %v1529 = vld [vmem:[%s165 + $0x20] sm:$0xff]
      %v1530 = vld [vmem:[%s165 + $0x28] sm:$0xff]
      %v1531 = vld [vmem:[%s165 + $0x30] sm:$0xff]
      %v1532 = vld [vmem:[%s165 + $0x38] sm:$0xff]
      %v1533 = vld [vmem:[%s165 + $0x40] sm:$0xff]
      %v1534 = vld [vmem:[%s165 + $0x48] sm:$0xff]
      %v1535 = vld [vmem:[%s165 + $0x50] sm:$0xff]
      %v1536 = vld [vmem:[%s165 + $0x58] sm:$0xff]
      %v1537 = vld [vmem:[%s165 + $0x60] sm:$0xff]
      %v1538 = vld [vmem:[%s165 + $0x68] sm:$0xff]
      %v1539 = vld [vmem:[%s165 + $0x70] sm:$0xff]
      %v1540 = vld [vmem:[%s165 + $0x78] sm:$0xff]
      %v1541 = vld [vmem:[%s165 + $0x80] sm:$0xff]
      %v1542 = vld [vmem:[%s165 + $0x88] sm:$0xff]
      %v1543 = vld [vmem:[%s165 + $0x90] sm:$0xff]
      %v1544 = vld [vmem:[%s165 + $0x98] sm:$0xff]
      %v1545 = vld [vmem:[%s165 + $0xa0] sm:$0xff]
      %v1546 = vld [vmem:[%s165 + $0xa8] sm:$0xff]
      %v1547 = vld [vmem:[%s165 + $0xb0] sm:$0xff]
      %v1548 = vld [vmem:[%s165 + $0xb8] sm:$0xff]
      %v1549 = vld [vmem:[%s165 + $0xc0] sm:$0xff]
      %v1550 = vld [vmem:[%s165 + $0xc8] sm:$0xff]
      %v1551 = vld [vmem:[%s165 + $0xd0] sm:$0xff]
      %v1552 = vld [vmem:[%s165 + $0xd8] sm:$0xff]
      %v1553 = vld [vmem:[%s165 + $0xe0] sm:$0xff]
      %v1554 = vld [vmem:[%s165 + $0xe8] sm:$0xff]
      %v1555 = vld [vmem:[%s165 + $0xf0] sm:$0xff]
      %v1556 = vld [vmem:[%s165 + $0xf8] sm:$0xff]
      %v1557 = vld [vmem:[%s165 + $0x100] sm:$0xff]
      %v1558 = vld [vmem:[%s165 + $0x108] sm:$0xff]
      %v1559 = vld [vmem:[%s165 + $0x110] sm:$0xff]
      %v1560 = vld [vmem:[%s165 + $0x118] sm:$0xff]
      %v1561 = vld [vmem:[%s165 + $0x120] sm:$0xff]
      %v1562 = vld [vmem:[%s165 + $0x128] sm:$0xff]
      %v1563 = vld [vmem:[%s165 + $0x130] sm:$0xff]
      %v1564 = vld [vmem:[%s165 + $0x138] sm:$0xff]
      %v1565 = vld [vmem:[%s165 + $0x140] sm:$0xff]
      %v1566 = vld [vmem:[%s165 + $0x148] sm:$0xff]
      %v1567 = vld [vmem:[%s165 + $0x150] sm:$0xff]
      %v1568 = vld [vmem:[%s165 + $0x158] sm:$0xff]
      %v1569 = vld [vmem:[%s165 + $0x160] sm:$0xff]
      %v1570 = vld [vmem:[%s165 + $0x168] sm:$0xff]
      %v1571 = vld [vmem:[%s165 + $0x170] sm:$0xff]
      %v1572 = vld [vmem:[%s165 + $0x178] sm:$0xff]
      %v1573 = vld [vmem:[%s165 + $0x180] sm:$0xff]
      %v1574 = vld [vmem:[%s165 + $0x188] sm:$0xff]
      %v1575 = vld [vmem:[%s165 + $0x190] sm:$0xff]
      %v1576 = vld [vmem:[%s165 + $0x198] sm:$0xff]
      %v1577 = vld [vmem:[%s165 + $0x1a0] sm:$0xff]
      %v1578 = vld [vmem:[%s165 + $0x1a8] sm:$0xff]
      %v1579 = vld [vmem:[%s165 + $0x1b0] sm:$0xff]
      %v1580 = vld [vmem:[%s165 + $0x1b8] sm:$0xff]
      %v1581 = vld [vmem:[%s165 + $0x1c0] sm:$0xff]
      %v1582 = vld [vmem:[%s165 + $0x1c8] sm:$0xff]
      %v1583 = vld [vmem:[%s165 + $0x1d0] sm:$0xff]
      %v1584 = vld [vmem:[%s165 + $0x1d8] sm:$0xff]
      %v1585 = vld [vmem:[%s165 + $0x1e0] sm:$0xff]
      %v1586 = vld [vmem:[%s165 + $0x1e8] sm:$0xff]
      %v1587 = vld [vmem:[%s165 + $0x1f0] sm:$0xff]
      %v1588 = vld [vmem:[%s165 + $0x1f8] sm:$0xff]
      %v1589 = vld [vmem:[%s165 + $0x200] sm:$0xff]
      %v1590 = vld [vmem:[%s165 + $0x208] sm:$0xff]
      %v1591 = vld [vmem:[%s165 + $0x210] sm:$0xff]
      %v1592 = vld [vmem:[%s165 + $0x218] sm:$0xff]
      %v1593 = vld [vmem:[%s165 + $0x220] sm:$0xff]
      %v1594 = vld [vmem:[%s165 + $0x228] sm:$0xff]
      %v1595 = vld [vmem:[%s165 + $0x230] sm:$0xff]
      %v1596 = vld [vmem:[%s165 + $0x238] sm:$0xff]
      %v1597 = vld [vmem:[%s165 + $0x240] sm:$0xff]
      %v1598 = vld [vmem:[%s165 + $0x248] sm:$0xff]
      %v1599 = vld [vmem:[%s165 + $0x250] sm:$0xff]
      %v1600 = vmul.f32 %v1450, %v1525
      %v1601 = vmul.f32 %v1451, %v1526
      %v1602 = vmul.f32 %v1452, %v1527
      %v1603 = vmul.f32 %v1453, %v1528
      %v1604 = vmul.f32 %v1454, %v1529
      %v1605 = vmul.f32 %v1455, %v1530
      %v1606 = vmul.f32 %v1456, %v1531
      %v1607 = vmul.f32 %v1457, %v1532
      %v1608 = vmul.f32 %v1458, %v1533
      %v1609 = vmul.f32 %v1459, %v1534
      %v1610 = vmul.f32 %v1460, %v1535
      %v1611 = vmul.f32 %v1461, %v1536
      %v1612 = vmul.f32 %v1462, %v1537
      %v1613 = vmul.f32 %v1463, %v1538
      %v1614 = vmul.f32 %v1464, %v1539
      %v1615 = vmul.f32 %v1465, %v1540
      %v1616 = vmul.f32 %v1466, %v1541
      %v1617 = vmul.f32 %v1467, %v1542
      %v1618 = vmul.f32 %v1468, %v1543
      %v1619 = vmul.f32 %v1469, %v1544
      %v1620 = vmul.f32 %v1470, %v1545
      %v1621 = vmul.f32 %v1471, %v1546
      %v1622 = vmul.f32 %v1472, %v1547
      %v1623 = vmul.f32 %v1473, %v1548
      %v1624 = vmul.f32 %v1474, %v1549
      %v1625 = vmul.f32 %v1475, %v1550
      %v1626 = vmul.f32 %v1476, %v1551
      %v1627 = vmul.f32 %v1477, %v1552
      %v1628 = vmul.f32 %v1478, %v1553
      %v1629 = vmul.f32 %v1479, %v1554
      %v1630 = vmul.f32 %v1480, %v1555
      %v1631 = vmul.f32 %v1481, %v1556
      %v1632 = vmul.f32 %v1482, %v1557
      %v1633 = vmul.f32 %v1483, %v1558
      %v1634 = vmul.f32 %v1484, %v1559
      %v1635 = vmul.f32 %v1485, %v1560
      %v1636 = vmul.f32 %v1486, %v1561
      %v1637 = vmul.f32 %v1487, %v1562
      %v1638 = vmul.f32 %v1488, %v1563
      %v1639 = vmul.f32 %v1489, %v1564
      %v1640 = vmul.f32 %v1490, %v1565
      %v1641 = vmul.f32 %v1491, %v1566
      %v1642 = vmul.f32 %v1492, %v1567
      %v1643 = vmul.f32 %v1493, %v1568
      %v1644 = vmul.f32 %v1494, %v1569
      %v1645 = vmul.f32 %v1495, %v1570
      %v1646 = vmul.f32 %v1496, %v1571
      %v1647 = vmul.f32 %v1497, %v1572
      %v1648 = vmul.f32 %v1498, %v1573
      %v1649 = vmul.f32 %v1499, %v1574
      %v1650 = vmul.f32 %v1500, %v1575
      %v1651 = vmul.f32 %v1501, %v1576
      %v1652 = vmul.f32 %v1502, %v1577
      %v1653 = vmul.f32 %v1503, %v1578
      %v1654 = vmul.f32 %v1504, %v1579
      %v1655 = vmul.f32 %v1505, %v1580
      %v1656 = vmul.f32 %v1506, %v1581
      %v1657 = vmul.f32 %v1507, %v1582
      %v1658 = vmul.f32 %v1508, %v1583
      %v1659 = vmul.f32 %v1509, %v1584
      %v1660 = vmul.f32 %v1510, %v1585
      %v1661 = vmul.f32 %v1511, %v1586
      %v1662 = vmul.f32 %v1512, %v1587
      %v1663 = vmul.f32 %v1513, %v1588
      %v1664 = vmul.f32 %v1514, %v1589
      %v1665 = vmul.f32 %v1515, %v1590
      %v1666 = vmul.f32 %v1516, %v1591
      %v1667 = vmul.f32 %v1517, %v1592
      %v1668 = vmul.f32 %v1518, %v1593
      %v1669 = vmul.f32 %v1519, %v1594
      %v1670 = vmul.f32 %v1520, %v1595
      %v1671 = vmul.f32 %v1521, %v1596
      %v1672 = vmul.f32 %v1522, %v1597
      %v1673 = vmul.f32 %v1523, %v1598
      %v1674 = vmul.f32 %v1524, %v1599
      %v1675 = vmul.f32 %v1075, %v1600
      %v1676 = vmul.f32 %v1076, %v1601
      %v1677 = vmul.f32 %v1077, %v1602
      %v1678 = vmul.f32 %v1078, %v1603
      %v1679 = vmul.f32 %v1079, %v1604
      %v1680 = vmul.f32 %v1080, %v1605
      %v1681 = vmul.f32 %v1081, %v1606
      %v1682 = vmul.f32 %v1082, %v1607
      %v1683 = vmul.f32 %v1083, %v1608
      %v1684 = vmul.f32 %v1084, %v1609
      %v1685 = vmul.f32 %v1085, %v1610
      %v1686 = vmul.f32 %v1086, %v1611
      %v1687 = vmul.f32 %v1087, %v1612
      %v1688 = vmul.f32 %v1088, %v1613
      %v1689 = vmul.f32 %v1089, %v1614
      %v1690 = vmul.f32 %v1090, %v1615
      %v1691 = vmul.f32 %v1091, %v1616
      %v1692 = vmul.f32 %v1092, %v1617
      %v1693 = vmul.f32 %v1093, %v1618
      %v1694 = vmul.f32 %v1094, %v1619
      %v1695 = vmul.f32 %v1095, %v1620
      %v1696 = vmul.f32 %v1096, %v1621
      %v1697 = vmul.f32 %v1097, %v1622
      %v1698 = vmul.f32 %v1098, %v1623
      %v1699 = vmul.f32 %v1099, %v1624
      %v1700 = vmul.f32 %v1100, %v1625
      %v1701 = vmul.f32 %v1101, %v1626
      %v1702 = vmul.f32 %v1102, %v1627
      %v1703 = vmul.f32 %v1103, %v1628
      %v1704 = vmul.f32 %v1104, %v1629
      %v1705 = vmul.f32 %v1105, %v1630
      %v1706 = vmul.f32 %v1106, %v1631
      %v1707 = vmul.f32 %v1107, %v1632
      %v1708 = vmul.f32 %v1108, %v1633
      %v1709 = vmul.f32 %v1109, %v1634
      %v1710 = vmul.f32 %v1110, %v1635
      %v1711 = vmul.f32 %v1111, %v1636
      %v1712 = vmul.f32 %v1112, %v1637
      %v1713 = vmul.f32 %v1113, %v1638
      %v1714 = vmul.f32 %v1114, %v1639
      %v1715 = vmul.f32 %v1115, %v1640
      %v1716 = vmul.f32 %v1116, %v1641
      %v1717 = vmul.f32 %v1117, %v1642
      %v1718 = vmul.f32 %v1118, %v1643
      %v1719 = vmul.f32 %v1119, %v1644
      %v1720 = vmul.f32 %v1120, %v1645
      %v1721 = vmul.f32 %v1121, %v1646
      %v1722 = vmul.f32 %v1122, %v1647
      %v1723 = vmul.f32 %v1123, %v1648
      %v1724 = vmul.f32 %v1124, %v1649
      %v1725 = vmul.f32 %v1125, %v1650
      %v1726 = vmul.f32 %v1126, %v1651
      %v1727 = vmul.f32 %v1127, %v1652
      %v1728 = vmul.f32 %v1128, %v1653
      %v1729 = vmul.f32 %v1129, %v1654
      %v1730 = vmul.f32 %v1130, %v1655
      %v1731 = vmul.f32 %v1131, %v1656
      %v1732 = vmul.f32 %v1132, %v1657
      %v1733 = vmul.f32 %v1133, %v1658
      %v1734 = vmul.f32 %v1134, %v1659
      %v1735 = vmul.f32 %v1135, %v1660
      %v1736 = vmul.f32 %v1136, %v1661
      %v1737 = vmul.f32 %v1137, %v1662
      %v1738 = vmul.f32 %v1138, %v1663
      %v1739 = vmul.f32 %v1139, %v1664
      %v1740 = vmul.f32 %v1140, %v1665
      %v1741 = vmul.f32 %v1141, %v1666
      %v1742 = vmul.f32 %v1142, %v1667
      %v1743 = vmul.f32 %v1143, %v1668
      %v1744 = vmul.f32 %v1144, %v1669
      %v1745 = vmul.f32 %v1145, %v1670
      %v1746 = vmul.f32 %v1146, %v1671
      %v1747 = vmul.f32 %v1147, %v1672
      %v1748 = vmul.f32 %v1148, %v1673
      %v1749 = vmul.f32 %v1149, %v1674
      %1825 = vrot.lane.b32.xlu0 %v1675, 1
      %v1826 = vpop.permute.xlu0 %1825
      %1827 = vrot.lane.b32.xlu0 %v1676, 1
      %v1828 = vpop.permute.xlu0 %1827
      %1829 = vrot.lane.b32.xlu0 %v1677, 1
      %v1830 = vpop.permute.xlu0 %1829
      %1831 = vrot.lane.b32.xlu0 %v1678, 1
      %v1832 = vpop.permute.xlu0 %1831
      %1833 = vrot.lane.b32.xlu0 %v1679, 1
      %v1834 = vpop.permute.xlu0 %1833
      %1835 = vrot.lane.b32.xlu0 %v1680, 1
      %v1836 = vpop.permute.xlu0 %1835
      %1837 = vrot.lane.b32.xlu0 %v1681, 1
      %v1838 = vpop.permute.xlu0 %1837
      %1839 = vrot.lane.b32.xlu0 %v1682, 1
      %v1840 = vpop.permute.xlu0 %1839
      %1841 = vrot.lane.b32.xlu0 %v1683, 1
      %v1842 = vpop.permute.xlu0 %1841
      %1843 = vrot.lane.b32.xlu0 %v1684, 1
      %v1844 = vpop.permute.xlu0 %1843
      %1845 = vrot.lane.b32.xlu0 %v1685, 1
      %v1846 = vpop.permute.xlu0 %1845
      %1847 = vrot.lane.b32.xlu0 %v1686, 1
      %v1848 = vpop.permute.xlu0 %1847
      %1849 = vrot.lane.b32.xlu0 %v1687, 1
      %v1850 = vpop.permute.xlu0 %1849
      %1851 = vrot.lane.b32.xlu0 %v1688, 1
      %v1852 = vpop.permute.xlu0 %1851
      %1853 = vrot.lane.b32.xlu0 %v1689, 1
      %v1854 = vpop.permute.xlu0 %1853
      %1855 = vrot.lane.b32.xlu0 %v1690, 1
      %v1856 = vpop.permute.xlu0 %1855
      %1857 = vrot.lane.b32.xlu0 %v1691, 1
      %v1858 = vpop.permute.xlu0 %1857
      %1859 = vrot.lane.b32.xlu0 %v1692, 1
      %v1860 = vpop.permute.xlu0 %1859
      %1861 = vrot.lane.b32.xlu0 %v1693, 1
      %v1862 = vpop.permute.xlu0 %1861
      %1863 = vrot.lane.b32.xlu0 %v1694, 1
      %v1864 = vpop.permute.xlu0 %1863
      %1865 = vrot.lane.b32.xlu0 %v1695, 1
      %v1866 = vpop.permute.xlu0 %1865
      %1867 = vrot.lane.b32.xlu0 %v1696, 1
      %v1868 = vpop.permute.xlu0 %1867
      %1869 = vrot.lane.b32.xlu0 %v1697, 1
      %v1870 = vpop.permute.xlu0 %1869
      %1871 = vrot.lane.b32.xlu0 %v1698, 1
      %v1872 = vpop.permute.xlu0 %1871
      %1873 = vrot.lane.b32.xlu0 %v1699, 1
      %v1874 = vpop.permute.xlu0 %1873
      %1875 = vrot.lane.b32.xlu0 %v1700, 1
      %v1876 = vpop.permute.xlu0 %1875
      %1877 = vrot.lane.b32.xlu0 %v1701, 1
      %v1878 = vpop.permute.xlu0 %1877
      %1879 = vrot.lane.b32.xlu0 %v1702, 1
      %v1880 = vpop.permute.xlu0 %1879
      %1881 = vrot.lane.b32.xlu0 %v1703, 1
      %v1882 = vpop.permute.xlu0 %1881
      %1883 = vrot.lane.b32.xlu0 %v1704, 1
      %v1884 = vpop.permute.xlu0 %1883
      %1885 = vrot.lane.b32.xlu0 %v1705, 1
      %v1886 = vpop.permute.xlu0 %1885
      %1887 = vrot.lane.b32.xlu0 %v1706, 1
      %v1888 = vpop.permute.xlu0 %1887
      %1889 = vrot.lane.b32.xlu0 %v1707, 1
      %v1890 = vpop.permute.xlu0 %1889
      %1891 = vrot.lane.b32.xlu0 %v1708, 1
      %v1892 = vpop.permute.xlu0 %1891
      %1893 = vrot.lane.b32.xlu0 %v1709, 1
      %v1894 = vpop.permute.xlu0 %1893
      %1895 = vrot.lane.b32.xlu0 %v1710, 1
      %v1896 = vpop.permute.xlu0 %1895
      %1897 = vrot.lane.b32.xlu0 %v1711, 1
      %v1898 = vpop.permute.xlu0 %1897
      %1899 = vrot.lane.b32.xlu0 %v1712, 1
      %v1900 = vpop.permute.xlu0 %1899
      %1901 = vrot.lane.b32.xlu0 %v1713, 1
      %v1902 = vpop.permute.xlu0 %1901
      %1903 = vrot.lane.b32.xlu0 %v1714, 1
      %v1904 = vpop.permute.xlu0 %1903
      %1905 = vrot.lane.b32.xlu0 %v1715, 1
      %v1906 = vpop.permute.xlu0 %1905
      %1907 = vrot.lane.b32.xlu0 %v1716, 1
      %v1908 = vpop.permute.xlu0 %1907
      %1909 = vrot.lane.b32.xlu0 %v1717, 1
      %v1910 = vpop.permute.xlu0 %1909
      %1911 = vrot.lane.b32.xlu0 %v1718, 1
      %v1912 = vpop.permute.xlu0 %1911
      %1913 = vrot.lane.b32.xlu0 %v1719, 1
      %v1914 = vpop.permute.xlu0 %1913
      %1915 = vrot.lane.b32.xlu0 %v1720, 1
      %v1916 = vpop.permute.xlu0 %1915
      %1917 = vrot.lane.b32.xlu0 %v1721, 1
      %v1918 = vpop.permute.xlu0 %1917
      %1919 = vrot.lane.b32.xlu0 %v1722, 1
      %v1920 = vpop.permute.xlu0 %1919
      %1921 = vrot.lane.b32.xlu0 %v1723, 1
      %v1922 = vpop.permute.xlu0 %1921
      %1923 = vrot.lane.b32.xlu0 %v1724, 1
      %v1924 = vpop.permute.xlu0 %1923
      %1925 = vrot.lane.b32.xlu0 %v1725, 1
      %v1926 = vpop.permute.xlu0 %1925
      %1927 = vrot.lane.b32.xlu0 %v1726, 1
      %v1928 = vpop.permute.xlu0 %1927
      %1929 = vrot.lane.b32.xlu0 %v1727, 1
      %v1930 = vpop.permute.xlu0 %1929
      %1931 = vrot.lane.b32.xlu0 %v1728, 1
      %v1932 = vpop.permute.xlu0 %1931
      %1933 = vrot.lane.b32.xlu0 %v1729, 1
      %v1934 = vpop.permute.xlu0 %1933
      %1935 = vrot.lane.b32.xlu0 %v1730, 1
      %v1936 = vpop.permute.xlu0 %1935
      %1937 = vrot.lane.b32.xlu0 %v1731, 1
      %v1938 = vpop.permute.xlu0 %1937
      %1939 = vrot.lane.b32.xlu0 %v1732, 1
      %v1940 = vpop.permute.xlu0 %1939
      %1941 = vrot.lane.b32.xlu0 %v1733, 1
      %v1942 = vpop.permute.xlu0 %1941
      %1943 = vrot.lane.b32.xlu0 %v1734, 1
      %v1944 = vpop.permute.xlu0 %1943
      %1945 = vrot.lane.b32.xlu0 %v1735, 1
      %v1946 = vpop.permute.xlu0 %1945
      %1947 = vrot.lane.b32.xlu0 %v1736, 1
      %v1948 = vpop.permute.xlu0 %1947
      %1949 = vrot.lane.b32.xlu0 %v1737, 1
      %v1950 = vpop.permute.xlu0 %1949
      %1951 = vrot.lane.b32.xlu0 %v1738, 1
      %v1952 = vpop.permute.xlu0 %1951
      %1953 = vrot.lane.b32.xlu0 %v1739, 1
      %v1954 = vpop.permute.xlu0 %1953
      %1955 = vrot.lane.b32.xlu0 %v1740, 1
      %v1956 = vpop.permute.xlu0 %1955
      %1957 = vrot.lane.b32.xlu0 %v1741, 1
      %v1958 = vpop.permute.xlu0 %1957
      %1959 = vrot.lane.b32.xlu0 %v1742, 1
      %v1960 = vpop.permute.xlu0 %1959
      %1961 = vrot.lane.b32.xlu0 %v1743, 1
      %v1962 = vpop.permute.xlu0 %1961
      %1963 = vrot.lane.b32.xlu0 %v1744, 1
      %v1964 = vpop.permute.xlu0 %1963
      %1965 = vrot.lane.b32.xlu0 %v1745, 1
      %v1966 = vpop.permute.xlu0 %1965
      %1967 = vrot.lane.b32.xlu0 %v1746, 1
      %v1968 = vpop.permute.xlu0 %1967
      %1969 = vrot.lane.b32.xlu0 %v1747, 1
      %v1970 = vpop.permute.xlu0 %1969
      %1971 = vrot.lane.b32.xlu0 %v1748, 1
      %v1972 = vpop.permute.xlu0 %1971
      %1973 = vrot.lane.b32.xlu0 %v1749, 1
      %v1974 = vpop.permute.xlu0 %1973
      %v2050 = vsub.f32 %v1525, %v1826
      %v2051 = vsub.f32 %v1526, %v1828
      %v2052 = vsub.f32 %v1527, %v1830
      %v2053 = vsub.f32 %v1528, %v1832
      %v2054 = vsub.f32 %v1529, %v1834
      %v2055 = vsub.f32 %v1530, %v1836
      %v2056 = vsub.f32 %v1531, %v1838
      %v2057 = vsub.f32 %v1532, %v1840
      %v2058 = vsub.f32 %v1533, %v1842
      %v2059 = vsub.f32 %v1534, %v1844
      %v2060 = vsub.f32 %v1535, %v1846
      %v2061 = vsub.f32 %v1536, %v1848
      %v2062 = vsub.f32 %v1537, %v1850
      %v2063 = vsub.f32 %v1538, %v1852
      %v2064 = vsub.f32 %v1539, %v1854
      %v2065 = vsub.f32 %v1540, %v1856
      %v2066 = vsub.f32 %v1541, %v1858
      %v2067 = vsub.f32 %v1542, %v1860
      %v2068 = vsub.f32 %v1543, %v1862
      %v2069 = vsub.f32 %v1544, %v1864
      %v2070 = vsub.f32 %v1545, %v1866
      %v2071 = vsub.f32 %v1546, %v1868
      %v2072 = vsub.f32 %v1547, %v1870
      %v2073 = vsub.f32 %v1548, %v1872
      %v2074 = vsub.f32 %v1549, %v1874
      %v2075 = vsub.f32 %v1550, %v1876
      %v2076 = vsub.f32 %v1551, %v1878
      %v2077 = vsub.f32 %v1552, %v1880
      %v2078 = vsub.f32 %v1553, %v1882
      %v2079 = vsub.f32 %v1554, %v1884
      %v2080 = vsub.f32 %v1555, %v1886
      %v2081 = vsub.f32 %v1556, %v1888
      %v2082 = vsub.f32 %v1557, %v1890
      %v2083 = vsub.f32 %v1558, %v1892
      %v2084 = vsub.f32 %v1559, %v1894
      %v2085 = vsub.f32 %v1560, %v1896
      %v2086 = vsub.f32 %v1561, %v1898
      %v2087 = vsub.f32 %v1562, %v1900
      %v2088 = vsub.f32 %v1563, %v1902
      %v2089 = vsub.f32 %v1564, %v1904
      %v2090 = vsub.f32 %v1565, %v1906
      %v2091 = vsub.f32 %v1566, %v1908
      %v2092 = vsub.f32 %v1567, %v1910
      %v2093 = vsub.f32 %v1568, %v1912
      %v2094 = vsub.f32 %v1569, %v1914
      %v2095 = vsub.f32 %v1570, %v1916
      %v2096 = vsub.f32 %v1571, %v1918
      %v2097 = vsub.f32 %v1572, %v1920
      %v2098 = vsub.f32 %v1573, %v1922
      %v2099 = vsub.f32 %v1574, %v1924
      %v2100 = vsub.f32 %v1575, %v1926
      %v2101 = vsub.f32 %v1576, %v1928
      %v2102 = vsub.f32 %v1577, %v1930
      %v2103 = vsub.f32 %v1578, %v1932
      %v2104 = vsub.f32 %v1579, %v1934
      %v2105 = vsub.f32 %v1580, %v1936
      %v2106 = vsub.f32 %v1581, %v1938
      %v2107 = vsub.f32 %v1582, %v1940
      %v2108 = vsub.f32 %v1583, %v1942
      %v2109 = vsub.f32 %v1584, %v1944
      %v2110 = vsub.f32 %v1585, %v1946
      %v2111 = vsub.f32 %v1586, %v1948
      %v2112 = vsub.f32 %v1587, %v1950
      %v2113 = vsub.f32 %v1588, %v1952
      %v2114 = vsub.f32 %v1589, %v1954
      %v2115 = vsub.f32 %v1590, %v1956
      %v2116 = vsub.f32 %v1591, %v1958
      %v2117 = vsub.f32 %v1592, %v1960
      %v2118 = vsub.f32 %v1593, %v1962
      %v2119 = vsub.f32 %v1594, %v1964
      %v2120 = vsub.f32 %v1595, %v1966
      %v2121 = vsub.f32 %v1596, %v1968
      %v2122 = vsub.f32 %v1597, %v1970
      %v2123 = vsub.f32 %v1598, %v1972
      %v2124 = vsub.f32 %v1599, %v1974
      %2126 = vset.pattern.permute.xlu0 0
      %2127 = vperm.xlu0 %2126, %v1600
      %v2128 = vpop.permute.xlu0 %2127
      %2131 = vset.pattern.permute.xlu0 0
      %2132 = vperm.xlu0 %2131, %v1601
      %v2133 = vpop.permute.xlu0 %2132
      %2136 = vset.pattern.permute.xlu0 0
      %2137 = vperm.xlu0 %2136, %v1602
      %v2138 = vpop.permute.xlu0 %2137
      %2141 = vset.pattern.permute.xlu0 0
      %2142 = vperm.xlu0 %2141, %v1603
      %v2143 = vpop.permute.xlu0 %2142
      %2146 = vset.pattern.permute.xlu0 0
      %2147 = vperm.xlu0 %2146, %v1604
      %v2148 = vpop.permute.xlu0 %2147
      %2151 = vset.pattern.permute.xlu0 0
      %2152 = vperm.xlu0 %2151, %v1605
      %v2153 = vpop.permute.xlu0 %2152
      %2156 = vset.pattern.permute.xlu0 0
      %2157 = vperm.xlu0 %2156, %v1606
      %v2158 = vpop.permute.xlu0 %2157
      %2161 = vset.pattern.permute.xlu0 0
      %2162 = vperm.xlu0 %2161, %v1607
      %v2163 = vpop.permute.xlu0 %2162
      %2166 = vset.pattern.permute.xlu0 0
      %2167 = vperm.xlu0 %2166, %v1608
      %v2168 = vpop.permute.xlu0 %2167
      %2171 = vset.pattern.permute.xlu0 0
      %2172 = vperm.xlu0 %2171, %v1609
      %v2173 = vpop.permute.xlu0 %2172
      %2176 = vset.pattern.permute.xlu0 0
      %2177 = vperm.xlu0 %2176, %v1610
      %v2178 = vpop.permute.xlu0 %2177
      %2181 = vset.pattern.permute.xlu0 0
      %2182 = vperm.xlu0 %2181, %v1611
      %v2183 = vpop.permute.xlu0 %2182
      %2186 = vset.pattern.permute.xlu0 0
      %2187 = vperm.xlu0 %2186, %v1612
      %v2188 = vpop.permute.xlu0 %2187
      %2191 = vset.pattern.permute.xlu0 0
      %2192 = vperm.xlu0 %2191, %v1613
      %v2193 = vpop.permute.xlu0 %2192
      %2196 = vset.pattern.permute.xlu0 0
      %2197 = vperm.xlu0 %2196, %v1614
      %v2198 = vpop.permute.xlu0 %2197
      %2201 = vset.pattern.permute.xlu0 0
      %2202 = vperm.xlu0 %2201, %v1615
      %v2203 = vpop.permute.xlu0 %2202
      %2206 = vset.pattern.permute.xlu0 0
      %2207 = vperm.xlu0 %2206, %v1616
      %v2208 = vpop.permute.xlu0 %2207
      %2211 = vset.pattern.permute.xlu0 0
      %2212 = vperm.xlu0 %2211, %v1617
      %v2213 = vpop.permute.xlu0 %2212
      %2216 = vset.pattern.permute.xlu0 0
      %2217 = vperm.xlu0 %2216, %v1618
      %v2218 = vpop.permute.xlu0 %2217
      %2221 = vset.pattern.permute.xlu0 0
      %2222 = vperm.xlu0 %2221, %v1619
      %v2223 = vpop.permute.xlu0 %2222
      %2226 = vset.pattern.permute.xlu0 0
      %2227 = vperm.xlu0 %2226, %v1620
      %v2228 = vpop.permute.xlu0 %2227
      %2231 = vset.pattern.permute.xlu0 0
      %2232 = vperm.xlu0 %2231, %v1621
      %v2233 = vpop.permute.xlu0 %2232
      %2236 = vset.pattern.permute.xlu0 0
      %2237 = vperm.xlu0 %2236, %v1622
      %v2238 = vpop.permute.xlu0 %2237
      %2241 = vset.pattern.permute.xlu0 0
      %2242 = vperm.xlu0 %2241, %v1623
      %v2243 = vpop.permute.xlu0 %2242
      %2246 = vset.pattern.permute.xlu0 0
      %2247 = vperm.xlu0 %2246, %v1624
      %v2248 = vpop.permute.xlu0 %2247
      %2251 = vset.pattern.permute.xlu0 0
      %2252 = vperm.xlu0 %2251, %v1625
      %v2253 = vpop.permute.xlu0 %2252
      %2256 = vset.pattern.permute.xlu0 0
      %2257 = vperm.xlu0 %2256, %v1626
      %v2258 = vpop.permute.xlu0 %2257
      %2261 = vset.pattern.permute.xlu0 0
      %2262 = vperm.xlu0 %2261, %v1627
      %v2263 = vpop.permute.xlu0 %2262
      %2266 = vset.pattern.permute.xlu0 0
      %2267 = vperm.xlu0 %2266, %v1628
      %v2268 = vpop.permute.xlu0 %2267
      %2271 = vset.pattern.permute.xlu0 0
      %2272 = vperm.xlu0 %2271, %v1629
      %v2273 = vpop.permute.xlu0 %2272
      %2276 = vset.pattern.permute.xlu0 0
      %2277 = vperm.xlu0 %2276, %v1630
      %v2278 = vpop.permute.xlu0 %2277
      %2281 = vset.pattern.permute.xlu0 0
      %2282 = vperm.xlu0 %2281, %v1631
      %v2283 = vpop.permute.xlu0 %2282
      %2286 = vset.pattern.permute.xlu0 0
      %2287 = vperm.xlu0 %2286, %v1632
      %v2288 = vpop.permute.xlu0 %2287
      %2291 = vset.pattern.permute.xlu0 0
      %2292 = vperm.xlu0 %2291, %v1633
      %v2293 = vpop.permute.xlu0 %2292
      %2296 = vset.pattern.permute.xlu0 0
      %2297 = vperm.xlu0 %2296, %v1634
      %v2298 = vpop.permute.xlu0 %2297
      %2301 = vset.pattern.permute.xlu0 0
      %2302 = vperm.xlu0 %2301, %v1635
      %v2303 = vpop.permute.xlu0 %2302
      %2306 = vset.pattern.permute.xlu0 0
      %2307 = vperm.xlu0 %2306, %v1636
      %v2308 = vpop.permute.xlu0 %2307
      %2311 = vset.pattern.permute.xlu0 0
      %2312 = vperm.xlu0 %2311, %v1637
      %v2313 = vpop.permute.xlu0 %2312
      %2316 = vset.pattern.permute.xlu0 0
      %2317 = vperm.xlu0 %2316, %v1638
      %v2318 = vpop.permute.xlu0 %2317
      %2321 = vset.pattern.permute.xlu0 0
      %2322 = vperm.xlu0 %2321, %v1639
      %v2323 = vpop.permute.xlu0 %2322
      %2326 = vset.pattern.permute.xlu0 0
      %2327 = vperm.xlu0 %2326, %v1640
      %v2328 = vpop.permute.xlu0 %2327
      %2331 = vset.pattern.permute.xlu0 0
      %2332 = vperm.xlu0 %2331, %v1641
      %v2333 = vpop.permute.xlu0 %2332
      %2336 = vset.pattern.permute.xlu0 0
      %2337 = vperm.xlu0 %2336, %v1642
      %v2338 = vpop.permute.xlu0 %2337
      %2341 = vset.pattern.permute.xlu0 0
      %2342 = vperm.xlu0 %2341, %v1643
      %v2343 = vpop.permute.xlu0 %2342
      %2346 = vset.pattern.permute.xlu0 0
      %2347 = vperm.xlu0 %2346, %v1644
      %v2348 = vpop.permute.xlu0 %2347
      %2351 = vset.pattern.permute.xlu0 0
      %2352 = vperm.xlu0 %2351, %v1645
      %v2353 = vpop.permute.xlu0 %2352
      %2356 = vset.pattern.permute.xlu0 0
      %2357 = vperm.xlu0 %2356, %v1646
      %v2358 = vpop.permute.xlu0 %2357
      %2361 = vset.pattern.permute.xlu0 0
      %2362 = vperm.xlu0 %2361, %v1647
      %v2363 = vpop.permute.xlu0 %2362
      %2366 = vset.pattern.permute.xlu0 0
      %2367 = vperm.xlu0 %2366, %v1648
      %v2368 = vpop.permute.xlu0 %2367
      %2371 = vset.pattern.permute.xlu0 0
      %2372 = vperm.xlu0 %2371, %v1649
      %v2373 = vpop.permute.xlu0 %2372
      %2376 = vset.pattern.permute.xlu0 0
      %2377 = vperm.xlu0 %2376, %v1650
      %v2378 = vpop.permute.xlu0 %2377
      %2381 = vset.pattern.permute.xlu0 0
      %2382 = vperm.xlu0 %2381, %v1651
      %v2383 = vpop.permute.xlu0 %2382
      %2386 = vset.pattern.permute.xlu0 0
      %2387 = vperm.xlu0 %2386, %v1652
      %v2388 = vpop.permute.xlu0 %2387
      %2391 = vset.pattern.permute.xlu0 0
      %2392 = vperm.xlu0 %2391, %v1653
      %v2393 = vpop.permute.xlu0 %2392
      %2396 = vset.pattern.permute.xlu0 0
      %2397 = vperm.xlu0 %2396, %v1654
      %v2398 = vpop.permute.xlu0 %2397
      %2401 = vset.pattern.permute.xlu0 0
      %2402 = vperm.xlu0 %2401, %v1655
      %v2403 = vpop.permute.xlu0 %2402
      %2406 = vset.pattern.permute.xlu0 0
      %2407 = vperm.xlu0 %2406, %v1656
      %v2408 = vpop.permute.xlu0 %2407
      %2411 = vset.pattern.permute.xlu0 0
      %2412 = vperm.xlu0 %2411, %v1657
      %v2413 = vpop.permute.xlu0 %2412
      %2416 = vset.pattern.permute.xlu0 0
      %2417 = vperm.xlu0 %2416, %v1658
      %v2418 = vpop.permute.xlu0 %2417
      %2421 = vset.pattern.permute.xlu0 0
      %2422 = vperm.xlu0 %2421, %v1659
      %v2423 = vpop.permute.xlu0 %2422
      %2426 = vset.pattern.permute.xlu0 0
      %2427 = vperm.xlu0 %2426, %v1660
      %v2428 = vpop.permute.xlu0 %2427
      %2431 = vset.pattern.permute.xlu0 0
      %2432 = vperm.xlu0 %2431, %v1661
      %v2433 = vpop.permute.xlu0 %2432
      %2436 = vset.pattern.permute.xlu0 0
      %2437 = vperm.xlu0 %2436, %v1662
      %v2438 = vpop.permute.xlu0 %2437
      %2441 = vset.pattern.permute.xlu0 0
      %2442 = vperm.xlu0 %2441, %v1663
      %v2443 = vpop.permute.xlu0 %2442
      %2446 = vset.pattern.permute.xlu0 0
      %2447 = vperm.xlu0 %2446, %v1664
      %v2448 = vpop.permute.xlu0 %2447
      %2451 = vset.pattern.permute.xlu0 0
      %2452 = vperm.xlu0 %2451, %v1665
      %v2453 = vpop.permute.xlu0 %2452
      %2456 = vset.pattern.permute.xlu0 0
      %2457 = vperm.xlu0 %2456, %v1666
      %v2458 = vpop.permute.xlu0 %2457
      %2461 = vset.pattern.permute.xlu0 0
      %2462 = vperm.xlu0 %2461, %v1667
      %v2463 = vpop.permute.xlu0 %2462
      %2466 = vset.pattern.permute.xlu0 0
      %2467 = vperm.xlu0 %2466, %v1668
      %v2468 = vpop.permute.xlu0 %2467
      %2471 = vset.pattern.permute.xlu0 0
      %2472 = vperm.xlu0 %2471, %v1669
      %v2473 = vpop.permute.xlu0 %2472
      %2476 = vset.pattern.permute.xlu0 0
      %2477 = vperm.xlu0 %2476, %v1670
      %v2478 = vpop.permute.xlu0 %2477
      %2481 = vset.pattern.permute.xlu0 0
      %2482 = vperm.xlu0 %2481, %v1671
      %v2483 = vpop.permute.xlu0 %2482
      %2486 = vset.pattern.permute.xlu0 0
      %2487 = vperm.xlu0 %2486, %v1672
      %v2488 = vpop.permute.xlu0 %2487
      %2491 = vset.pattern.permute.xlu0 0
      %2492 = vperm.xlu0 %2491, %v1673
      %v2493 = vpop.permute.xlu0 %2492
      %2496 = vset.pattern.permute.xlu0 0
      %2497 = vperm.xlu0 %2496, %v1674
      %v2498 = vpop.permute.xlu0 %2497
      %v2500 = vmul.f32 %v174, %v2128
      %v2501 = vmul.f32 %v175, %v2128
      %v2502 = vmul.f32 %v176, %v2133
      %v2503 = vmul.f32 %v177, %v2133
      %v2504 = vmul.f32 %v178, %v2138
      %v2505 = vmul.f32 %v179, %v2138
      %v2506 = vmul.f32 %v180, %v2143
      %v2507 = vmul.f32 %v181, %v2143
      %v2508 = vmul.f32 %v182, %v2148
      %v2509 = vmul.f32 %v183, %v2148
      %v2510 = vmul.f32 %v184, %v2153
      %v2511 = vmul.f32 %v185, %v2153
      %v2512 = vmul.f32 %v186, %v2158
      %v2513 = vmul.f32 %v187, %v2158
      %v2514 = vmul.f32 %v188, %v2163
      %v2515 = vmul.f32 %v189, %v2163
      %v2516 = vmul.f32 %v190, %v2168
      %v2517 = vmul.f32 %v191, %v2168
      %v2518 = vmul.f32 %v192, %v2173
      %v2519 = vmul.f32 %v193, %v2173
      %v2520 = vmul.f32 %v194, %v2178
      %v2521 = vmul.f32 %v195, %v2178
      %v2522 = vmul.f32 %v196, %v2183
      %v2523 = vmul.f32 %v197, %v2183
      %v2524 = vmul.f32 %v198, %v2188
      %v2525 = vmul.f32 %v199, %v2188
      %v2526 = vmul.f32 %v200, %v2193
      %v2527 = vmul.f32 %v201, %v2193
      %v2528 = vmul.f32 %v202, %v2198
      %v2529 = vmul.f32 %v203, %v2198
      %v2530 = vmul.f32 %v204, %v2203
      %v2531 = vmul.f32 %v205, %v2203
      %v2532 = vmul.f32 %v206, %v2208
      %v2533 = vmul.f32 %v207, %v2208
      %v2534 = vmul.f32 %v208, %v2213
      %v2535 = vmul.f32 %v209, %v2213
      %v2536 = vmul.f32 %v210, %v2218
      %v2537 = vmul.f32 %v211, %v2218
      %v2538 = vmul.f32 %v212, %v2223
      %v2539 = vmul.f32 %v213, %v2223
      %v2540 = vmul.f32 %v214, %v2228
      %v2541 = vmul.f32 %v215, %v2228
      %v2542 = vmul.f32 %v216, %v2233
      %v2543 = vmul.f32 %v217, %v2233
      %v2544 = vmul.f32 %v218, %v2238
      %v2545 = vmul.f32 %v219, %v2238
      %v2546 = vmul.f32 %v220, %v2243
      %v2547 = vmul.f32 %v221, %v2243
      %v2548 = vmul.f32 %v222, %v2248
      %v2549 = vmul.f32 %v223, %v2248
      %v2550 = vmul.f32 %v224, %v2253
      %v2551 = vmul.f32 %v225, %v2253
      %v2552 = vmul.f32 %v226, %v2258
      %v2553 = vmul.f32 %v227, %v2258
      %v2554 = vmul.f32 %v228, %v2263
      %v2555 = vmul.f32 %v229, %v2263
      %v2556 = vmul.f32 %v230, %v2268
      %v2557 = vmul.f32 %v231, %v2268
      %v2558 = vmul.f32 %v232, %v2273
      %v2559 = vmul.f32 %v233, %v2273
      %v2560 = vmul.f32 %v234, %v2278
      %v2561 = vmul.f32 %v235, %v2278
      %v2562 = vmul.f32 %v236, %v2283
      %v2563 = vmul.f32 %v237, %v2283
      %v2564 = vmul.f32 %v238, %v2288
      %v2565 = vmul.f32 %v239, %v2288
      %v2566 = vmul.f32 %v240, %v2293
      %v2567 = vmul.f32 %v241, %v2293
      %v2568 = vmul.f32 %v242, %v2298
      %v2569 = vmul.f32 %v243, %v2298
      %v2570 = vmul.f32 %v244, %v2303
      %v2571 = vmul.f32 %v245, %v2303
      %v2572 = vmul.f32 %v246, %v2308
      %v2573 = vmul.f32 %v247, %v2308
      %v2574 = vmul.f32 %v248, %v2313
      %v2575 = vmul.f32 %v249, %v2313
      %v2576 = vmul.f32 %v250, %v2318
      %v2577 = vmul.f32 %v251, %v2318
      %v2578 = vmul.f32 %v252, %v2323
      %v2579 = vmul.f32 %v253, %v2323
      %v2580 = vmul.f32 %v254, %v2328
      %v2581 = vmul.f32 %v255, %v2328
      %v2582 = vmul.f32 %v256, %v2333
      %v2583 = vmul.f32 %v257, %v2333
      %v2584 = vmul.f32 %v258, %v2338
      %v2585 = vmul.f32 %v259, %v2338
      %v2586 = vmul.f32 %v260, %v2343
      %v2587 = vmul.f32 %v261, %v2343
      %v2588 = vmul.f32 %v262, %v2348
      %v2589 = vmul.f32 %v263, %v2348
      %v2590 = vmul.f32 %v264, %v2353
      %v2591 = vmul.f32 %v265, %v2353
      %v2592 = vmul.f32 %v266, %v2358
      %v2593 = vmul.f32 %v267, %v2358
      %v2594 = vmul.f32 %v268, %v2363
      %v2595 = vmul.f32 %v269, %v2363
      %v2596 = vmul.f32 %v270, %v2368
      %v2597 = vmul.f32 %v271, %v2368
      %v2598 = vmul.f32 %v272, %v2373
      %v2599 = vmul.f32 %v273, %v2373
      %v2600 = vmul.f32 %v274, %v2378
      %v2601 = vmul.f32 %v275, %v2378
      %v2602 = vmul.f32 %v276, %v2383
      %v2603 = vmul.f32 %v277, %v2383
      %v2604 = vmul.f32 %v278, %v2388
      %v2605 = vmul.f32 %v279, %v2388
      %v2606 = vmul.f32 %v280, %v2393
      %v2607 = vmul.f32 %v281, %v2393
      %v2608 = vmul.f32 %v282, %v2398
      %v2609 = vmul.f32 %v283, %v2398
      %v2610 = vmul.f32 %v284, %v2403
      %v2611 = vmul.f32 %v285, %v2403
      %v2612 = vmul.f32 %v286, %v2408
      %v2613 = vmul.f32 %v287, %v2408
      %v2614 = vmul.f32 %v288, %v2413
      %v2615 = vmul.f32 %v289, %v2413
      %v2616 = vmul.f32 %v290, %v2418
      %v2617 = vmul.f32 %v291, %v2418
      %v2618 = vmul.f32 %v292, %v2423
      %v2619 = vmul.f32 %v293, %v2423
      %v2620 = vmul.f32 %v294, %v2428
      %v2621 = vmul.f32 %v295, %v2428
      %v2622 = vmul.f32 %v296, %v2433
      %v2623 = vmul.f32 %v297, %v2433
      %v2624 = vmul.f32 %v298, %v2438
      %v2625 = vmul.f32 %v299, %v2438
      %v2626 = vmul.f32 %v300, %v2443
      %v2627 = vmul.f32 %v301, %v2443
      %v2628 = vmul.f32 %v302, %v2448
      %v2629 = vmul.f32 %v303, %v2448
      %v2630 = vmul.f32 %v304, %v2453
      %v2631 = vmul.f32 %v305, %v2453
      %v2632 = vmul.f32 %v306, %v2458
      %v2633 = vmul.f32 %v307, %v2458
      %v2634 = vmul.f32 %v308, %v2463
      %v2635 = vmul.f32 %v309, %v2463
      %v2636 = vmul.f32 %v310, %v2468
      %v2637 = vmul.f32 %v311, %v2468
      %v2638 = vmul.f32 %v312, %v2473
      %v2639 = vmul.f32 %v313, %v2473
      %v2640 = vmul.f32 %v314, %v2478
      %v2641 = vmul.f32 %v315, %v2478
      %v2642 = vmul.f32 %v316, %v2483
      %v2643 = vmul.f32 %v317, %v2483
      %v2644 = vmul.f32 %v318, %v2488
      %v2645 = vmul.f32 %v319, %v2488
      %v2646 = vmul.f32 %v320, %v2493
      %v2647 = vmul.f32 %v321, %v2493
      %v2648 = vmul.f32 %v322, %v2498
      %v2649 = vmul.f32 %v323, %v2498
      %2651 = vset.pattern.permute.xlu0 1
      %2652 = vperm.xlu0 %2651, %v2050
      %v2653 = vpop.permute.xlu0 %2652
      %2656 = vset.pattern.permute.xlu0 1
      %2657 = vperm.xlu0 %2656, %v2051
      %v2658 = vpop.permute.xlu0 %2657
      %2661 = vset.pattern.permute.xlu0 1
      %2662 = vperm.xlu0 %2661, %v2052
      %v2663 = vpop.permute.xlu0 %2662
      %2666 = vset.pattern.permute.xlu0 1
      %2667 = vperm.xlu0 %2666, %v2053
      %v2668 = vpop.permute.xlu0 %2667
      %2671 = vset.pattern.permute.xlu0 1
      %2672 = vperm.xlu0 %2671, %v2054
      %v2673 = vpop.permute.xlu0 %2672
      %2676 = vset.pattern.permute.xlu0 1
      %2677 = vperm.xlu0 %2676, %v2055
      %v2678 = vpop.permute.xlu0 %2677
      %2681 = vset.pattern.permute.xlu0 1
      %2682 = vperm.xlu0 %2681, %v2056
      %v2683 = vpop.permute.xlu0 %2682
      %2686 = vset.pattern.permute.xlu0 1
      %2687 = vperm.xlu0 %2686, %v2057
      %v2688 = vpop.permute.xlu0 %2687
      %2691 = vset.pattern.permute.xlu0 1
      %2692 = vperm.xlu0 %2691, %v2058
      %v2693 = vpop.permute.xlu0 %2692
      %2696 = vset.pattern.permute.xlu0 1
      %2697 = vperm.xlu0 %2696, %v2059
      %v2698 = vpop.permute.xlu0 %2697
      %2701 = vset.pattern.permute.xlu0 1
      %2702 = vperm.xlu0 %2701, %v2060
      %v2703 = vpop.permute.xlu0 %2702
      %2706 = vset.pattern.permute.xlu0 1
      %2707 = vperm.xlu0 %2706, %v2061
      %v2708 = vpop.permute.xlu0 %2707
      %2711 = vset.pattern.permute.xlu0 1
      %2712 = vperm.xlu0 %2711, %v2062
      %v2713 = vpop.permute.xlu0 %2712
      %2716 = vset.pattern.permute.xlu0 1
      %2717 = vperm.xlu0 %2716, %v2063
      %v2718 = vpop.permute.xlu0 %2717
      %2721 = vset.pattern.permute.xlu0 1
      %2722 = vperm.xlu0 %2721, %v2064
      %v2723 = vpop.permute.xlu0 %2722
      %2726 = vset.pattern.permute.xlu0 1
      %2727 = vperm.xlu0 %2726, %v2065
      %v2728 = vpop.permute.xlu0 %2727
      %2731 = vset.pattern.permute.xlu0 1
      %2732 = vperm.xlu0 %2731, %v2066
      %v2733 = vpop.permute.xlu0 %2732
      %2736 = vset.pattern.permute.xlu0 1
      %2737 = vperm.xlu0 %2736, %v2067
      %v2738 = vpop.permute.xlu0 %2737
      %2741 = vset.pattern.permute.xlu0 1
      %2742 = vperm.xlu0 %2741, %v2068
      %v2743 = vpop.permute.xlu0 %2742
      %2746 = vset.pattern.permute.xlu0 1
      %2747 = vperm.xlu0 %2746, %v2069
      %v2748 = vpop.permute.xlu0 %2747
      %2751 = vset.pattern.permute.xlu0 1
      %2752 = vperm.xlu0 %2751, %v2070
      %v2753 = vpop.permute.xlu0 %2752
      %2756 = vset.pattern.permute.xlu0 1
      %2757 = vperm.xlu0 %2756, %v2071
      %v2758 = vpop.permute.xlu0 %2757
      %2761 = vset.pattern.permute.xlu0 1
      %2762 = vperm.xlu0 %2761, %v2072
      %v2763 = vpop.permute.xlu0 %2762
      %2766 = vset.pattern.permute.xlu0 1
      %2767 = vperm.xlu0 %2766, %v2073
      %v2768 = vpop.permute.xlu0 %2767
      %2771 = vset.pattern.permute.xlu0 1
      %2772 = vperm.xlu0 %2771, %v2074
      %v2773 = vpop.permute.xlu0 %2772
      %2776 = vset.pattern.permute.xlu0 1
      %2777 = vperm.xlu0 %2776, %v2075
      %v2778 = vpop.permute.xlu0 %2777
      %2781 = vset.pattern.permute.xlu0 1
      %2782 = vperm.xlu0 %2781, %v2076
      %v2783 = vpop.permute.xlu0 %2782
      %2786 = vset.pattern.permute.xlu0 1
      %2787 = vperm.xlu0 %2786, %v2077
      %v2788 = vpop.permute.xlu0 %2787
      %2791 = vset.pattern.permute.xlu0 1
      %2792 = vperm.xlu0 %2791, %v2078
      %v2793 = vpop.permute.xlu0 %2792
      %2796 = vset.pattern.permute.xlu0 1
      %2797 = vperm.xlu0 %2796, %v2079
      %v2798 = vpop.permute.xlu0 %2797
      %2801 = vset.pattern.permute.xlu0 1
      %2802 = vperm.xlu0 %2801, %v2080
      %v2803 = vpop.permute.xlu0 %2802
      %2806 = vset.pattern.permute.xlu0 1
      %2807 = vperm.xlu0 %2806, %v2081
      %v2808 = vpop.permute.xlu0 %2807
      %2811 = vset.pattern.permute.xlu0 1
      %2812 = vperm.xlu0 %2811, %v2082
      %v2813 = vpop.permute.xlu0 %2812
      %2816 = vset.pattern.permute.xlu0 1
      %2817 = vperm.xlu0 %2816, %v2083
      %v2818 = vpop.permute.xlu0 %2817
      %2821 = vset.pattern.permute.xlu0 1
      %2822 = vperm.xlu0 %2821, %v2084
      %v2823 = vpop.permute.xlu0 %2822
      %2826 = vset.pattern.permute.xlu0 1
      %2827 = vperm.xlu0 %2826, %v2085
      %v2828 = vpop.permute.xlu0 %2827
      %2831 = vset.pattern.permute.xlu0 1
      %2832 = vperm.xlu0 %2831, %v2086
      %v2833 = vpop.permute.xlu0 %2832
      %2836 = vset.pattern.permute.xlu0 1
      %2837 = vperm.xlu0 %2836, %v2087
      %v2838 = vpop.permute.xlu0 %2837
      %2841 = vset.pattern.permute.xlu0 1
      %2842 = vperm.xlu0 %2841, %v2088
      %v2843 = vpop.permute.xlu0 %2842
      %2846 = vset.pattern.permute.xlu0 1
      %2847 = vperm.xlu0 %2846, %v2089
      %v2848 = vpop.permute.xlu0 %2847
      %2851 = vset.pattern.permute.xlu0 1
      %2852 = vperm.xlu0 %2851, %v2090
      %v2853 = vpop.permute.xlu0 %2852
      %2856 = vset.pattern.permute.xlu0 1
      %2857 = vperm.xlu0 %2856, %v2091
      %v2858 = vpop.permute.xlu0 %2857
      %2861 = vset.pattern.permute.xlu0 1
      %2862 = vperm.xlu0 %2861, %v2092
      %v2863 = vpop.permute.xlu0 %2862
      %2866 = vset.pattern.permute.xlu0 1
      %2867 = vperm.xlu0 %2866, %v2093
      %v2868 = vpop.permute.xlu0 %2867
      %2871 = vset.pattern.permute.xlu0 1
      %2872 = vperm.xlu0 %2871, %v2094
      %v2873 = vpop.permute.xlu0 %2872
      %2876 = vset.pattern.permute.xlu0 1
      %2877 = vperm.xlu0 %2876, %v2095
      %v2878 = vpop.permute.xlu0 %2877
      %2881 = vset.pattern.permute.xlu0 1
      %2882 = vperm.xlu0 %2881, %v2096
      %v2883 = vpop.permute.xlu0 %2882
      %2886 = vset.pattern.permute.xlu0 1
      %2887 = vperm.xlu0 %2886, %v2097
      %v2888 = vpop.permute.xlu0 %2887
      %2891 = vset.pattern.permute.xlu0 1
      %2892 = vperm.xlu0 %2891, %v2098
      %v2893 = vpop.permute.xlu0 %2892
      %2896 = vset.pattern.permute.xlu0 1
      %2897 = vperm.xlu0 %2896, %v2099
      %v2898 = vpop.permute.xlu0 %2897
      %2901 = vset.pattern.permute.xlu0 1
      %2902 = vperm.xlu0 %2901, %v2100
      %v2903 = vpop.permute.xlu0 %2902
      %2906 = vset.pattern.permute.xlu0 1
      %2907 = vperm.xlu0 %2906, %v2101
      %v2908 = vpop.permute.xlu0 %2907
      %2911 = vset.pattern.permute.xlu0 1
      %2912 = vperm.xlu0 %2911, %v2102
      %v2913 = vpop.permute.xlu0 %2912
      %2916 = vset.pattern.permute.xlu0 1
      %2917 = vperm.xlu0 %2916, %v2103
      %v2918 = vpop.permute.xlu0 %2917
      %2921 = vset.pattern.permute.xlu0 1
      %2922 = vperm.xlu0 %2921, %v2104
      %v2923 = vpop.permute.xlu0 %2922
      %2926 = vset.pattern.permute.xlu0 1
      %2927 = vperm.xlu0 %2926, %v2105
      %v2928 = vpop.permute.xlu0 %2927
      %2931 = vset.pattern.permute.xlu0 1
      %2932 = vperm.xlu0 %2931, %v2106
      %v2933 = vpop.permute.xlu0 %2932
      %2936 = vset.pattern.permute.xlu0 1
      %2937 = vperm.xlu0 %2936, %v2107
      %v2938 = vpop.permute.xlu0 %2937
      %2941 = vset.pattern.permute.xlu0 1
      %2942 = vperm.xlu0 %2941, %v2108
      %v2943 = vpop.permute.xlu0 %2942
      %2946 = vset.pattern.permute.xlu0 1
      %2947 = vperm.xlu0 %2946, %v2109
      %v2948 = vpop.permute.xlu0 %2947
      %2951 = vset.pattern.permute.xlu0 1
      %2952 = vperm.xlu0 %2951, %v2110
      %v2953 = vpop.permute.xlu0 %2952
      %2956 = vset.pattern.permute.xlu0 1
      %2957 = vperm.xlu0 %2956, %v2111
      %v2958 = vpop.permute.xlu0 %2957
      %2961 = vset.pattern.permute.xlu0 1
      %2962 = vperm.xlu0 %2961, %v2112
      %v2963 = vpop.permute.xlu0 %2962
      %2966 = vset.pattern.permute.xlu0 1
      %2967 = vperm.xlu0 %2966, %v2113
      %v2968 = vpop.permute.xlu0 %2967
      %2971 = vset.pattern.permute.xlu0 1
      %2972 = vperm.xlu0 %2971, %v2114
      %v2973 = vpop.permute.xlu0 %2972
      %2976 = vset.pattern.permute.xlu0 1
      %2977 = vperm.xlu0 %2976, %v2115
      %v2978 = vpop.permute.xlu0 %2977
      %2981 = vset.pattern.permute.xlu0 1
      %2982 = vperm.xlu0 %2981, %v2116
      %v2983 = vpop.permute.xlu0 %2982
      %2986 = vset.pattern.permute.xlu0 1
      %2987 = vperm.xlu0 %2986, %v2117
      %v2988 = vpop.permute.xlu0 %2987
      %2991 = vset.pattern.permute.xlu0 1
      %2992 = vperm.xlu0 %2991, %v2118
      %v2993 = vpop.permute.xlu0 %2992
      %2996 = vset.pattern.permute.xlu0 1
      %2997 = vperm.xlu0 %2996, %v2119
      %v2998 = vpop.permute.xlu0 %2997
      %3001 = vset.pattern.permute.xlu0 1
      %3002 = vperm.xlu0 %3001, %v2120
      %v3003 = vpop.permute.xlu0 %3002
      %3006 = vset.pattern.permute.xlu0 1
      %3007 = vperm.xlu0 %3006, %v2121
      %v3008 = vpop.permute.xlu0 %3007
      %3011 = vset.pattern.permute.xlu0 1
      %3012 = vperm.xlu0 %3011, %v2122
      %v3013 = vpop.permute.xlu0 %3012
      %3016 = vset.pattern.permute.xlu0 1
      %3017 = vperm.xlu0 %3016, %v2123
      %v3018 = vpop.permute.xlu0 %3017
      %3021 = vset.pattern.permute.xlu0 1
      %3022 = vperm.xlu0 %3021, %v2124
      %v3023 = vpop.permute.xlu0 %3022
      %v3025 = vadd.f32 %v2500, %v2653
      %v3026 = vadd.f32 %v2501, %v2653
      %v3027 = vadd.f32 %v2502, %v2658
      %v3028 = vadd.f32 %v2503, %v2658
      %v3029 = vadd.f32 %v2504, %v2663
      %v3030 = vadd.f32 %v2505, %v2663
      %v3031 = vadd.f32 %v2506, %v2668
      %v3032 = vadd.f32 %v2507, %v2668
      %v3033 = vadd.f32 %v2508, %v2673
      %v3034 = vadd.f32 %v2509, %v2673
      %v3035 = vadd.f32 %v2510, %v2678
      %v3036 = vadd.f32 %v2511, %v2678
      %v3037 = vadd.f32 %v2512, %v2683
      %v3038 = vadd.f32 %v2513, %v2683
      %v3039 = vadd.f32 %v2514, %v2688
      %v3040 = vadd.f32 %v2515, %v2688
      %v3041 = vadd.f32 %v2516, %v2693
      %v3042 = vadd.f32 %v2517, %v2693
      %v3043 = vadd.f32 %v2518, %v2698
      %v3044 = vadd.f32 %v2519, %v2698
      %v3045 = vadd.f32 %v2520, %v2703
      %v3046 = vadd.f32 %v2521, %v2703
      %v3047 = vadd.f32 %v2522, %v2708
      %v3048 = vadd.f32 %v2523, %v2708
      %v3049 = vadd.f32 %v2524, %v2713
      %v3050 = vadd.f32 %v2525, %v2713
      %v3051 = vadd.f32 %v2526, %v2718
      %v3052 = vadd.f32 %v2527, %v2718
      %v3053 = vadd.f32 %v2528, %v2723
      %v3054 = vadd.f32 %v2529, %v2723
      %v3055 = vadd.f32 %v2530, %v2728
      %v3056 = vadd.f32 %v2531, %v2728
      %v3057 = vadd.f32 %v2532, %v2733
      %v3058 = vadd.f32 %v2533, %v2733
      %v3059 = vadd.f32 %v2534, %v2738
      %v3060 = vadd.f32 %v2535, %v2738
      %v3061 = vadd.f32 %v2536, %v2743
      %v3062 = vadd.f32 %v2537, %v2743
      %v3063 = vadd.f32 %v2538, %v2748
      %v3064 = vadd.f32 %v2539, %v2748
      %v3065 = vadd.f32 %v2540, %v2753
      %v3066 = vadd.f32 %v2541, %v2753
      %v3067 = vadd.f32 %v2542, %v2758
      %v3068 = vadd.f32 %v2543, %v2758
      %v3069 = vadd.f32 %v2544, %v2763
      %v3070 = vadd.f32 %v2545, %v2763
      %v3071 = vadd.f32 %v2546, %v2768
      %v3072 = vadd.f32 %v2547, %v2768
      %v3073 = vadd.f32 %v2548, %v2773
      %v3074 = vadd.f32 %v2549, %v2773
      %v3075 = vadd.f32 %v2550, %v2778
      %v3076 = vadd.f32 %v2551, %v2778
      %v3077 = vadd.f32 %v2552, %v2783
      %v3078 = vadd.f32 %v2553, %v2783
      %v3079 = vadd.f32 %v2554, %v2788
      %v3080 = vadd.f32 %v2555, %v2788
      %v3081 = vadd.f32 %v2556, %v2793
      %v3082 = vadd.f32 %v2557, %v2793
      %v3083 = vadd.f32 %v2558, %v2798
      %v3084 = vadd.f32 %v2559, %v2798
      %v3085 = vadd.f32 %v2560, %v2803
      %v3086 = vadd.f32 %v2561, %v2803
      %v3087 = vadd.f32 %v2562, %v2808
      %v3088 = vadd.f32 %v2563, %v2808
      %v3089 = vadd.f32 %v2564, %v2813
      %v3090 = vadd.f32 %v2565, %v2813
      %v3091 = vadd.f32 %v2566, %v2818
      %v3092 = vadd.f32 %v2567, %v2818
      %v3093 = vadd.f32 %v2568, %v2823
      %v3094 = vadd.f32 %v2569, %v2823
      %v3095 = vadd.f32 %v2570, %v2828
      %v3096 = vadd.f32 %v2571, %v2828
      %v3097 = vadd.f32 %v2572, %v2833
      %v3098 = vadd.f32 %v2573, %v2833
      %v3099 = vadd.f32 %v2574, %v2838
      %v3100 = vadd.f32 %v2575, %v2838
      %v3101 = vadd.f32 %v2576, %v2843
      %v3102 = vadd.f32 %v2577, %v2843
      %v3103 = vadd.f32 %v2578, %v2848
      %v3104 = vadd.f32 %v2579, %v2848
      %v3105 = vadd.f32 %v2580, %v2853
      %v3106 = vadd.f32 %v2581, %v2853
      %v3107 = vadd.f32 %v2582, %v2858
      %v3108 = vadd.f32 %v2583, %v2858
      %v3109 = vadd.f32 %v2584, %v2863
      %v3110 = vadd.f32 %v2585, %v2863
      %v3111 = vadd.f32 %v2586, %v2868
      %v3112 = vadd.f32 %v2587, %v2868
      %v3113 = vadd.f32 %v2588, %v2873
      %v3114 = vadd.f32 %v2589, %v2873
      %v3115 = vadd.f32 %v2590, %v2878
      %v3116 = vadd.f32 %v2591, %v2878
      %v3117 = vadd.f32 %v2592, %v2883
      %v3118 = vadd.f32 %v2593, %v2883
      %v3119 = vadd.f32 %v2594, %v2888
      %v3120 = vadd.f32 %v2595, %v2888
      %v3121 = vadd.f32 %v2596, %v2893
      %v3122 = vadd.f32 %v2597, %v2893
      %v3123 = vadd.f32 %v2598, %v2898
      %v3124 = vadd.f32 %v2599, %v2898
      %v3125 = vadd.f32 %v2600, %v2903
      %v3126 = vadd.f32 %v2601, %v2903
      %v3127 = vadd.f32 %v2602, %v2908
      %v3128 = vadd.f32 %v2603, %v2908
      %v3129 = vadd.f32 %v2604, %v2913
      %v3130 = vadd.f32 %v2605, %v2913
      %v3131 = vadd.f32 %v2606, %v2918
      %v3132 = vadd.f32 %v2607, %v2918
      %v3133 = vadd.f32 %v2608, %v2923
      %v3134 = vadd.f32 %v2609, %v2923
      %v3135 = vadd.f32 %v2610, %v2928
      %v3136 = vadd.f32 %v2611, %v2928
      %v3137 = vadd.f32 %v2612, %v2933
      %v3138 = vadd.f32 %v2613, %v2933
      %v3139 = vadd.f32 %v2614, %v2938
      %v3140 = vadd.f32 %v2615, %v2938
      %v3141 = vadd.f32 %v2616, %v2943
      %v3142 = vadd.f32 %v2617, %v2943
      %v3143 = vadd.f32 %v2618, %v2948
      %v3144 = vadd.f32 %v2619, %v2948
      %v3145 = vadd.f32 %v2620, %v2953
      %v3146 = vadd.f32 %v2621, %v2953
      %v3147 = vadd.f32 %v2622, %v2958
      %v3148 = vadd.f32 %v2623, %v2958
      %v3149 = vadd.f32 %v2624, %v2963
      %v3150 = vadd.f32 %v2625, %v2963
      %v3151 = vadd.f32 %v2626, %v2968
      %v3152 = vadd.f32 %v2627, %v2968
      %v3153 = vadd.f32 %v2628, %v2973
      %v3154 = vadd.f32 %v2629, %v2973
      %v3155 = vadd.f32 %v2630, %v2978
      %v3156 = vadd.f32 %v2631, %v2978
      %v3157 = vadd.f32 %v2632, %v2983
      %v3158 = vadd.f32 %v2633, %v2983
      %v3159 = vadd.f32 %v2634, %v2988
      %v3160 = vadd.f32 %v2635, %v2988
      %v3161 = vadd.f32 %v2636, %v2993
      %v3162 = vadd.f32 %v2637, %v2993
      %v3163 = vadd.f32 %v2638, %v2998
      %v3164 = vadd.f32 %v2639, %v2998
      %v3165 = vadd.f32 %v2640, %v3003
      %v3166 = vadd.f32 %v2641, %v3003
      %v3167 = vadd.f32 %v2642, %v3008
      %v3168 = vadd.f32 %v2643, %v3008
      %v3169 = vadd.f32 %v2644, %v3013
      %v3170 = vadd.f32 %v2645, %v3013
      %v3171 = vadd.f32 %v2646, %v3018
      %v3172 = vadd.f32 %v2647, %v3018
      %v3173 = vadd.f32 %v2648, %v3023
      %v3174 = vadd.f32 %v2649, %v3023
      %3175 = vst [vmem:[%s172] sm:$0xff] %v3025
      %3176 = vst.msk [vmem:[%s172 + $0x8] sm:$0xff] %vm324, %v3026
      %3177 = vst [vmem:[%s172 + $0x10] sm:$0xff] %v3027
      %3178 = vst.msk [vmem:[%s172 + $0x18] sm:$0xff] %vm324, %v3028
      %3179 = vst [vmem:[%s172 + $0x20] sm:$0xff] %v3029
      %3180 = vst.msk [vmem:[%s172 + $0x28] sm:$0xff] %vm324, %v3030
      %3181 = vst [vmem:[%s172 + $0x30] sm:$0xff] %v3031
      %3182 = vst.msk [vmem:[%s172 + $0x38] sm:$0xff] %vm324, %v3032
      %3183 = vst [vmem:[%s172 + $0x40] sm:$0xff] %v3033
      %3184 = vst.msk [vmem:[%s172 + $0x48] sm:$0xff] %vm324, %v3034
      %3185 = vst [vmem:[%s172 + $0x50] sm:$0xff] %v3035
      %3186 = vst.msk [vmem:[%s172 + $0x58] sm:$0xff] %vm324, %v3036
      %3187 = vst [vmem:[%s172 + $0x60] sm:$0xff] %v3037
      %3188 = vst.msk [vmem:[%s172 + $0x68] sm:$0xff] %vm324, %v3038
      %3189 = vst [vmem:[%s172 + $0x70] sm:$0xff] %v3039
      %3190 = vst.msk [vmem:[%s172 + $0x78] sm:$0xff] %vm324, %v3040
      %3191 = vst [vmem:[%s172 + $0x80] sm:$0xff] %v3041
      %3192 = vst.msk [vmem:[%s172 + $0x88] sm:$0xff] %vm324, %v3042
      %3193 = vst [vmem:[%s172 + $0x90] sm:$0xff] %v3043
      %3194 = vst.msk [vmem:[%s172 + $0x98] sm:$0xff] %vm324, %v3044
      %3195 = vst [vmem:[%s172 + $0xa0] sm:$0xff] %v3045
      %3196 = vst.msk [vmem:[%s172 + $0xa8] sm:$0xff] %vm324, %v3046
      %3197 = vst [vmem:[%s172 + $0xb0] sm:$0xff] %v3047
      %3198 = vst.msk [vmem:[%s172 + $0xb8] sm:$0xff] %vm324, %v3048
      %3199 = vst [vmem:[%s172 + $0xc0] sm:$0xff] %v3049
      %3200 = vst.msk [vmem:[%s172 + $0xc8] sm:$0xff] %vm324, %v3050
      %3201 = vst [vmem:[%s172 + $0xd0] sm:$0xff] %v3051
      %3202 = vst.msk [vmem:[%s172 + $0xd8] sm:$0xff] %vm324, %v3052
      %3203 = vst [vmem:[%s172 + $0xe0] sm:$0xff] %v3053
      %3204 = vst.msk [vmem:[%s172 + $0xe8] sm:$0xff] %vm324, %v3054
      %3205 = vst [vmem:[%s172 + $0xf0] sm:$0xff] %v3055
      %3206 = vst.msk [vmem:[%s172 + $0xf8] sm:$0xff] %vm324, %v3056
      %3207 = vst [vmem:[%s172 + $0x100] sm:$0xff] %v3057
      %3208 = vst.msk [vmem:[%s172 + $0x108] sm:$0xff] %vm324, %v3058
      %3209 = vst [vmem:[%s172 + $0x110] sm:$0xff] %v3059
      %3210 = vst.msk [vmem:[%s172 + $0x118] sm:$0xff] %vm324, %v3060
      %3211 = vst [vmem:[%s172 + $0x120] sm:$0xff] %v3061
      %3212 = vst.msk [vmem:[%s172 + $0x128] sm:$0xff] %vm324, %v3062
      %3213 = vst [vmem:[%s172 + $0x130] sm:$0xff] %v3063
      %3214 = vst.msk [vmem:[%s172 + $0x138] sm:$0xff] %vm324, %v3064
      %3215 = vst [vmem:[%s172 + $0x140] sm:$0xff] %v3065
      %3216 = vst.msk [vmem:[%s172 + $0x148] sm:$0xff] %vm324, %v3066
      %3217 = vst [vmem:[%s172 + $0x150] sm:$0xff] %v3067
      %3218 = vst.msk [vmem:[%s172 + $0x158] sm:$0xff] %vm324, %v3068
      %3219 = vst [vmem:[%s172 + $0x160] sm:$0xff] %v3069
      %3220 = vst.msk [vmem:[%s172 + $0x168] sm:$0xff] %vm324, %v3070
      %3221 = vst [vmem:[%s172 + $0x170] sm:$0xff] %v3071
      %3222 = vst.msk [vmem:[%s172 + $0x178] sm:$0xff] %vm324, %v3072
      %3223 = vst [vmem:[%s172 + $0x180] sm:$0xff] %v3073
      %3224 = vst.msk [vmem:[%s172 + $0x188] sm:$0xff] %vm324, %v3074
      %3225 = vst [vmem:[%s172 + $0x190] sm:$0xff] %v3075
      %3226 = vst.msk [vmem:[%s172 + $0x198] sm:$0xff] %vm324, %v3076
      %3227 = vst [vmem:[%s172 + $0x1a0] sm:$0xff] %v3077
      %3228 = vst.msk [vmem:[%s172 + $0x1a8] sm:$0xff] %vm324, %v3078
      %3229 = vst [vmem:[%s172 + $0x1b0] sm:$0xff] %v3079
      %3230 = vst.msk [vmem:[%s172 + $0x1b8] sm:$0xff] %vm324, %v3080
      %3231 = vst [vmem:[%s172 + $0x1c0] sm:$0xff] %v3081
      %3232 = vst.msk [vmem:[%s172 + $0x1c8] sm:$0xff] %vm324, %v3082
      %3233 = vst [vmem:[%s172 + $0x1d0] sm:$0xff] %v3083
      %3234 = vst.msk [vmem:[%s172 + $0x1d8] sm:$0xff] %vm324, %v3084
      %3235 = vst [vmem:[%s172 + $0x1e0] sm:$0xff] %v3085
      %3236 = vst.msk [vmem:[%s172 + $0x1e8] sm:$0xff] %vm324, %v3086
      %3237 = vst [vmem:[%s172 + $0x1f0] sm:$0xff] %v3087
      %3238 = vst.msk [vmem:[%s172 + $0x1f8] sm:$0xff] %vm324, %v3088
      %3239 = vst [vmem:[%s172 + $0x200] sm:$0xff] %v3089
      %3240 = vst.msk [vmem:[%s172 + $0x208] sm:$0xff] %vm324, %v3090
      %3241 = vst [vmem:[%s172 + $0x210] sm:$0xff] %v3091
      %3242 = vst.msk [vmem:[%s172 + $0x218] sm:$0xff] %vm324, %v3092
      %3243 = vst [vmem:[%s172 + $0x220] sm:$0xff] %v3093
      %3244 = vst.msk [vmem:[%s172 + $0x228] sm:$0xff] %vm324, %v3094
      %3245 = vst [vmem:[%s172 + $0x230] sm:$0xff] %v3095
      %3246 = vst.msk [vmem:[%s172 + $0x238] sm:$0xff] %vm324, %v3096
      %3247 = vst [vmem:[%s172 + $0x240] sm:$0xff] %v3097
      %3248 = vst.msk [vmem:[%s172 + $0x248] sm:$0xff] %vm324, %v3098
      %3249 = vst [vmem:[%s172 + $0x250] sm:$0xff] %v3099
      %3250 = vst.msk [vmem:[%s172 + $0x258] sm:$0xff] %vm324, %v3100
      %3251 = vst [vmem:[%s172 + $0x260] sm:$0xff] %v3101
      %3252 = vst.msk [vmem:[%s172 + $0x268] sm:$0xff] %vm324, %v3102
      %3253 = vst [vmem:[%s172 + $0x270] sm:$0xff] %v3103
      %3254 = vst.msk [vmem:[%s172 + $0x278] sm:$0xff] %vm324, %v3104
      %3255 = vst [vmem:[%s172 + $0x280] sm:$0xff] %v3105
      %3256 = vst.msk [vmem:[%s172 + $0x288] sm:$0xff] %vm324, %v3106
      %3257 = vst [vmem:[%s172 + $0x290] sm:$0xff] %v3107
      %3258 = vst.msk [vmem:[%s172 + $0x298] sm:$0xff] %vm324, %v3108
      %3259 = vst [vmem:[%s172 + $0x2a0] sm:$0xff] %v3109
      %3260 = vst.msk [vmem:[%s172 + $0x2a8] sm:$0xff] %vm324, %v3110
      %3261 = vst [vmem:[%s172 + $0x2b0] sm:$0xff] %v3111
      %3262 = vst.msk [vmem:[%s172 + $0x2b8] sm:$0xff] %vm324, %v3112
      %3263 = vst [vmem:[%s172 + $0x2c0] sm:$0xff] %v3113
      %3264 = vst.msk [vmem:[%s172 + $0x2c8] sm:$0xff] %vm324, %v3114
      %3265 = vst [vmem:[%s172 + $0x2d0] sm:$0xff] %v3115
      %3266 = vst.msk [vmem:[%s172 + $0x2d8] sm:$0xff] %vm324, %v3116
      %3267 = vst [vmem:[%s172 + $0x2e0] sm:$0xff] %v3117
      %3268 = vst.msk [vmem:[%s172 + $0x2e8] sm:$0xff] %vm324, %v3118
      %3269 = vst [vmem:[%s172 + $0x2f0] sm:$0xff] %v3119
      %3270 = vst.msk [vmem:[%s172 + $0x2f8] sm:$0xff] %vm324, %v3120
      %3271 = vst [vmem:[%s172 + $0x300] sm:$0xff] %v3121
      %3272 = vst.msk [vmem:[%s172 + $0x308] sm:$0xff] %vm324, %v3122
      %3273 = vst [vmem:[%s172 + $0x310] sm:$0xff] %v3123
      %3274 = vst.msk [vmem:[%s172 + $0x318] sm:$0xff] %vm324, %v3124
      %3275 = vst [vmem:[%s172 + $0x320] sm:$0xff] %v3125
      %3276 = vst.msk [vmem:[%s172 + $0x328] sm:$0xff] %vm324, %v3126
      %3277 = vst [vmem:[%s172 + $0x330] sm:$0xff] %v3127
      %3278 = vst.msk [vmem:[%s172 + $0x338] sm:$0xff] %vm324, %v3128
      %3279 = vst [vmem:[%s172 + $0x340] sm:$0xff] %v3129
      %3280 = vst.msk [vmem:[%s172 + $0x348] sm:$0xff] %vm324, %v3130
      %3281 = vst [vmem:[%s172 + $0x350] sm:$0xff] %v3131
      %3282 = vst.msk [vmem:[%s172 + $0x358] sm:$0xff] %vm324, %v3132
      %3283 = vst [vmem:[%s172 + $0x360] sm:$0xff] %v3133
      %3284 = vst.msk [vmem:[%s172 + $0x368] sm:$0xff] %vm324, %v3134
      %3285 = vst [vmem:[%s172 + $0x370] sm:$0xff] %v3135
      %3286 = vst.msk [vmem:[%s172 + $0x378] sm:$0xff] %vm324, %v3136
      %3287 = vst [vmem:[%s172 + $0x380] sm:$0xff] %v3137
      %3288 = vst.msk [vmem:[%s172 + $0x388] sm:$0xff] %vm324, %v3138
      %3289 = vst [vmem:[%s172 + $0x390] sm:$0xff] %v3139
      %3290 = vst.msk [vmem:[%s172 + $0x398] sm:$0xff] %vm324, %v3140
      %3291 = vst [vmem:[%s172 + $0x3a0] sm:$0xff] %v3141
      %3292 = vst.msk [vmem:[%s172 + $0x3a8] sm:$0xff] %vm324, %v3142
      %3293 = vst [vmem:[%s172 + $0x3b0] sm:$0xff] %v3143
      %3294 = vst.msk [vmem:[%s172 + $0x3b8] sm:$0xff] %vm324, %v3144
      %3295 = vst [vmem:[%s172 + $0x3c0] sm:$0xff] %v3145
      %3296 = vst.msk [vmem:[%s172 + $0x3c8] sm:$0xff] %vm324, %v3146
      %3297 = vst [vmem:[%s172 + $0x3d0] sm:$0xff] %v3147
      %3298 = vst.msk [vmem:[%s172 + $0x3d8] sm:$0xff] %vm324, %v3148
      %3299 = vst [vmem:[%s172 + $0x3e0] sm:$0xff] %v3149
      %3300 = vst.msk [vmem:[%s172 + $0x3e8] sm:$0xff] %vm324, %v3150
      %3301 = vst [vmem:[%s172 + $0x3f0] sm:$0xff] %v3151
      %3302 = vst.msk [vmem:[%s172 + $0x3f8] sm:$0xff] %vm324, %v3152
      %3303 = vst [vmem:[%s172 + $0x400] sm:$0xff] %v3153
      %3304 = vst.msk [vmem:[%s172 + $0x408] sm:$0xff] %vm324, %v3154
      %3305 = vst [vmem:[%s172 + $0x410] sm:$0xff] %v3155
      %3306 = vst.msk [vmem:[%s172 + $0x418] sm:$0xff] %vm324, %v3156
      %3307 = vst [vmem:[%s172 + $0x420] sm:$0xff] %v3157
      %3308 = vst.msk [vmem:[%s172 + $0x428] sm:$0xff] %vm324, %v3158
      %3309 = vst [vmem:[%s172 + $0x430] sm:$0xff] %v3159
      %3310 = vst.msk [vmem:[%s172 + $0x438] sm:$0xff] %vm324, %v3160
      %3311 = vst [vmem:[%s172 + $0x440] sm:$0xff] %v3161
      %3312 = vst.msk [vmem:[%s172 + $0x448] sm:$0xff] %vm324, %v3162
      %3313 = vst [vmem:[%s172 + $0x450] sm:$0xff] %v3163
      %3314 = vst.msk [vmem:[%s172 + $0x458] sm:$0xff] %vm324, %v3164
      %3315 = vst [vmem:[%s172 + $0x460] sm:$0xff] %v3165
      %3316 = vst.msk [vmem:[%s172 + $0x468] sm:$0xff] %vm324, %v3166
      %3317 = vst [vmem:[%s172 + $0x470] sm:$0xff] %v3167
      %3318 = vst.msk [vmem:[%s172 + $0x478] sm:$0xff] %vm324, %v3168
      %3319 = vst [vmem:[%s172 + $0x480] sm:$0xff] %v3169
      %3320 = vst.msk [vmem:[%s172 + $0x488] sm:$0xff] %vm324, %v3170
      %3321 = vst [vmem:[%s172 + $0x490] sm:$0xff] %v3171
      %3322 = vst.msk [vmem:[%s172 + $0x498] sm:$0xff] %vm324, %v3172
      %3323 = vst [vmem:[%s172 + $0x4a0] sm:$0xff] %v3173
      %3324 = vst.msk [vmem:[%s172 + $0x4a8] sm:$0xff] %vm324, %v3174
      %s3325 = smul.u32 75, %s13
      %p3326 = scmp.lt.s32.totalorder %s3325, 149
      %s3327 = scalar_select %p3326, %s3325, 149
      %s3328 = smul.addr %s3327, 2
      %s3329 = smul.addr %s3328, 8
      %s3330 = scalar_lea.vmem %s2, %s3329
      // Predicated region
      $region29: #{tpu_custom_call.1} parent=27 // pred_check
        %p3331 = pneg %p83
      $region30: #{tpu_custom_call.1} parent=27 // pred_check_branch
        %3333 = sbr.rel (%p3331) target = $region32
      $region31: #{tpu_custom_call.1} parent=27 // pred_region
        %s3334 = smul.u32 75, %s13
      $region32: #{tpu_custom_call.1} parent=27 // pred_fallthru
        _
    $region28: #{tpu_custom_call.1} parent=5 // pred_fallthru
      _
    %p3335 = scmp.le.s32.totalorder 2, %s8
    // Predicated region
    $region33: #{tpu_custom_call.1} parent=5 // pred_check
      %p3336 = pneg %p3335
    $region34: #{tpu_custom_call.1} parent=5 // pred_check_branch
      %3338 = sbr.rel (%p3336) target = $region36
    $region35: #{tpu_custom_call.1} parent=5 // pred_region
      %s3339 = ssub.s32 %s8, 2
      // Predicated region
      $region37: #{tpu_custom_call.1} parent=35 // pred_check
        %p3340 = pneg %p89
      $region38: #{tpu_custom_call.1} parent=35 // pred_check_branch
        %3342 = sbr.rel (%p3340) target = $region40
      $region39: #{tpu_custom_call.1} parent=35 // pred_region
        %s3343 = smul.u32 75, %s14
        %p3344 = scmp.lt.s32.totalorder %s3343, 149
        %s3345 = scalar_select %p3344, %s3343, 149
        %s3346 = smul.addr %s3345, 2
        %s3347 = smul.addr %s3346, 8
        %s3348 = scalar_lea.vmem %s2, %s3347
      $region40: #{tpu_custom_call.1} parent=35 // pred_fallthru
        _
    $region36: #{tpu_custom_call.1} parent=5 // pred_fallthru
      _
  $region6: #{tpu_custom_call.1} parent=0 // loop_footer
    %s12 = sadd.s32 1, %s8
  $region7: #{tpu_custom_call.1} parent=0 // loop_footer_branch
    %7 = sbr.rel target = $region3
  $region8: #{tpu_custom_call.1} parent=0 // loop_exit
    _

</llo_original>
